<compile_context>
chip_gen: v6e
topology: v6e:2x2x1
jax: 0.10.0
libtpu: 0.0.40
codegen_flags: <defaults>
</compile_context>

<pallas_src>
import jax
import jax.numpy as jnp
from jax.experimental import pallas as pl
from jax.experimental.pallas import tpu as pltpu

NEG_SLOPE = 0.01
EPS = 1e-5

# Matmul-operand dtype. jnp.bfloat16 gives the native MXU path on v6e/v7x;
# left at f32 so numerics match the f32 reference within 1e-3 without
# re-validation (InstanceNorm stats / residual / LeakyReLU are f32 regardless).
MATMUL_DTYPE = jnp.float32


def _is_pow2(n):
    return n > 0 and (n & (n - 1)) == 0


def make_block_kernel(H, W, C, B):
    """Kernel closure working on a (C, L) slab, L = B*H*W (batch in lanes)."""
    HW = H * W
    L = B * HW
    inv_hw = 1.0 / HW

    # Tap order must match the weight row order: row = (dy*3 + dx)*C + c.
    offsets = [(dy, dx) for dy in range(3) for dx in range(3)]

    def lrelu(x):
        return jnp.where(x >= 0, x, NEG_SLOPE * x)

    def kernel(x_ref, w1_ref, w2_ref, o_ref, patch_ref):
        x = x_ref[0].astype(jnp.float32)                     # (C, L), lane-dense

        # ---- per-lane coordinates from ONE (1, L) iota; pow2 fast path ------
        lane = jax.lax.broadcasted_iota(jnp.int32, (1, L), 1)
        if _is_pow2(W) and _is_pow2(HW):
            s_in = lane & (HW - 1)                           # flat index inside image
            w_idx = s_in & (W - 1)
            h_idx = s_in >> (W.bit_length() - 1)
            img = lane >> (HW.bit_length() - 1)
        else:
            s_in = lane % HW
            w_idx = s_in % W
            h_idx = s_in // W
            img = lane // HW

        # 0/1 edge-validity masks, f32, shape (1, L) (sublane-broadcast later)
        one, zero = jnp.float32(1.0), jnp.float32(0.0)
        ok_l = jnp.where(w_idx >= 1, one, zero)
        ok_r = jnp.where(w_idx <= W - 2, one, zero)
        ok_t = jnp.where(h_idx >= 1, one, zero)
        ok_b = jnp.where(h_idx <= H - 2, one, zero)

        # Per-tap combined mask (None for the centre tap). These masks also
        # cancel roll's wrap across row / image boundaries of the flat lane axis.
        tap_masks = []
        for dy, dx in offsets:
            m = None
            if dy == 0:
                m = ok_t
            elif dy == 2:
                m = ok_b
            if dx == 0:
                m = ok_l if m is None else m * ok_l
            elif dx == 2:
                m = ok_r if m is None else m * ok_r
            tap_masks.append(m)

        # Per-image 0/1 masks for InstanceNorm statistics (only when B > 1).
        img_masks = None
        if B > 1:
            img_masks = [jnp.where(img == b, one, zero) for b in range(B)]

        def conv3x3(src, w_ref):
            # src: (C, L) f32. Build the (9C, L) im2col patch in VMEM scratch
            # (one pltpu.roll + one mask multiply per tap), then ONE MXU dot.
            # NOTE on MXU occupancy: with Cout=C=8 the dot uses only 8 MXU rows
            # and K=9C pads to 128; the B*HW lane width is the mitigation.
            for t, ((dy, dx), m) in enumerate(zip(offsets, tap_masks)):
                k = (dy - 1) * W + (dx - 1)                  # source offset
                # want tap[:, i] = src[:, i + k]  ==  jnp.roll(src, -k, axis=1)
                tap = src if k == 0 else pltpu.roll(src, (-k) % L, axis=1)
                if m is not None:
                    tap = tap * m                            # zero invalid lanes
                patch_ref[pl.ds(t * C, C), :] = tap.astype(patch_ref.dtype)
            return jnp.dot(w_ref[...], patch_ref[...],
                           preferred_element_type=jnp.float32)

        def inorm(y):
            # Per-(channel, image) stats over HW lanes; biased var; eps in rsqrt.
            if B == 1:
                mean = jnp.mean(y, axis=1, keepdims=True)
                d = y - mean
                var = jnp.mean(d * d, axis=1, keepdims=True)
                return d * jax.lax.rsqrt(var + EPS)
            mean_full = None
            for m in img_masks:
                mb = jnp.sum(y * m, axis=1, keepdims=True) * inv_hw   # (C, 1)
                term = mb * m                                          # (C, L)
                mean_full = term if mean_full is None else mean_full + term
            d = y - mean_full
            inv_full = None
            for m in img_masks:
                vb = jnp.sum((d * d) * m, axis=1, keepdims=True) * inv_hw
                term = jax.lax.rsqrt(vb + EPS) * m
                inv_full = term if inv_full is None else inv_full + term
            return d * inv_full

        out1 = lrelu(inorm(conv3x3(x, w1_ref)))
        out2 = inorm(conv3x3(out1, w2_ref))
        out = lrelu(out2 + x)                                # identity shortcut
        o_ref[...] = out[None, :, :].astype(o_ref.dtype)     # (1, C, L), dense

    return kernel


def _pick_images_per_step(N, C, HW, matmul_itemsize, *,
                          target_lanes=2048, vmem_budget_bytes=8 << 20):
    """Images per grid step: grow the matmul lane width until it is large
    enough to amortize MXU weight pushes / per-step overhead, while keeping
    the per-step working set small enough for v7x's 64 MiB VMEM (32 MiB
    scoped default).  Stops early once the lane target is met so larger
    batches keep >= 2 grid steps for 2-TensorCore parts."""
    per_image = 9 * C * HW * matmul_itemsize + 16 * C * HW * 4
    best = 1
    for B in range(1, N + 1):
        if N % B:
            continue
        if B * per_image > vmem_budget_bytes:
            break
        best = B
        if B * HW >= target_lanes:
            break
    return best


def basic_block1(x_nchw, w1_pt, w2_pt):
    """x_nchw: (N, Cin, H, W); w*_pt: PyTorch OIHW (Cout, Cin, 3, 3)."""
    N, Cin, H, W = x_nchw.shape
    Cp = w1_pt.shape[0]
    assert w1_pt.shape == (Cp, Cin, 3, 3) and w2_pt.shape == (Cp, Cp, 3, 3)
    assert Cin == Cp, "only the identity-shortcut configuration is implemented"
    HW = H * W
    itemsize = x_nchw.dtype.itemsize
    mm_itemsize = jnp.dtype(MATMUL_DTYPE).itemsize

    B = _pick_images_per_step(N, Cin, HW, mm_itemsize)
    G = N // B
    L = B * HW

    # Wrapper-side layout plumbing (tiny): (N,C,H,W) -> (G, C, B*HW) so every
    # grid step sees one lane-dense slab with the batch merged into lanes.
    x = x_nchw.reshape(G, B, Cin, HW).transpose(0, 2, 1, 3).reshape(G, Cin, L)
    # OIHW -> (Cout, kh, kw, Cin) -> (Cout, 9*Cin); row index (kh*3+kw)*Cin+ci
    w1 = jnp.transpose(w1_pt, (0, 2, 3, 1)).reshape(Cp, 9 * Cin).astype(MATMUL_DTYPE)
    w2 = jnp.transpose(w2_pt, (0, 2, 3, 1)).reshape(Cp, 9 * Cp).astype(MATMUL_DTYPE)

    kernel = make_block_kernel(H, W, Cin, B)

    # Per-step VMEM footprint (double-buffered I/O blocks + scratch + temps).
    blk_in = Cin * L * itemsize
    blk_out = Cp * L * itemsize
    w_bytes = (w1.size + w2.size) * mm_itemsize
    patch_bytes = 9 * Cin * L * mm_itemsize
    temps = 12 * Cp * L * 4
    vmem_est = 2 * (blk_in + blk_out) + 2 * w_bytes + patch_bytes + temps
    vmem_limit = int(min(64 << 20, max(4 << 20, 2 * vmem_est)))

    flops = N * 2 * (2 * HW * 9 * Cin * Cp)                  # two 3x3 convs
    bytes_accessed = (x.size * itemsize + (w1.size + w2.size) * mm_itemsize
                      + N * Cp * HW * itemsize)

    out = pl.pallas_call(
        kernel,
        out_shape=jax.ShapeDtypeStruct((G, Cp, L), x_nchw.dtype),
        grid_spec=pltpu.PrefetchScalarGridSpec(
            num_scalar_prefetch=0,
            grid=(G,),
            in_specs=[
                pl.BlockSpec((1, Cin, L), lambda i: (i, 0, 0)),
                # constant index maps: weight blocks are fetched only once
                pl.BlockSpec((Cp, 9 * Cin), lambda i: (0, 0)),
                pl.BlockSpec((Cp, 9 * Cp), lambda i: (0, 0)),
            ],
            out_specs=pl.BlockSpec((1, Cp, L), lambda i: (i, 0, 0)),
            scratch_shapes=[pltpu.VMEM((9 * Cin, L), MATMUL_DTYPE)],
        ),
        compiler_params=pltpu.CompilerParams(
            dimension_semantics=("parallel",),
            vmem_limit_bytes=vmem_limit),
        cost_estimate=pl.CostEstimate(
            flops=flops,
            transcendentals=2 * N * Cp,          # one rsqrt per (image, chan) per IN
            bytes_accessed=bytes_accessed),
    )(x, w1, w2)

    # (G, Cp, B*HW) -> (N, Cp, H, W)
    return out.reshape(G, Cp, B, HW).transpose(0, 2, 1, 3).reshape(N, Cp, H, W)


def basic_block1_reference(x, w1, w2):
    """Pure-JAX/XLA reference matching the PyTorch forward (NCHW)."""
    def conv(x, w):
        return jax.lax.conv_general_dilated(
            x, w, (1, 1), ((1, 1), (1, 1)),
            dimension_numbers=("NCHW", "OIHW", "NCHW"))

    def inorm(x):
        m = jnp.mean(x, axis=(2, 3), keepdims=True)
        v = jnp.mean((x - m) ** 2, axis=(2, 3), keepdims=True)
        return (x - m) / jnp.sqrt(v + EPS)

    def lrelu(x):
        return jnp.where(x >= 0, x, NEG_SLOPE * x)

    out = lrelu(inorm(conv(x, w1)))
    out = inorm(conv(out, w2))
    out = out + x
    return lrelu(out)


if __name__ == "__main__":
    # Small, deterministic configuration: batch=2, in_planes=planes=8, 16x16.
    N, C, H, W = 2, 8, 16, 16
    key = jax.random.PRNGKey(0)
    kx, k1, k2 = jax.random.split(key, 3)

    x = jax.random.normal(kx, (N, C, H, W), dtype=jnp.float32)
    # Deterministic conv weights (kaiming-ish scale), PyTorch OIHW layout.
    w1 = jax.random.normal(k1, (C, C, 3, 3), dtype=jnp.float32) * 0.2
    w2 = jax.random.normal(k2, (C, C, 3, 3), dtype=jnp.float32) * 0.2

    out = jax.block_until_ready(basic_block1(x, w1, w2))
    ref = jax.block_until_ready(basic_block1_reference(x, w1, w2))

    assert out.shape == (N, C, H, W), out.shape
    assert jnp.allclose(out, ref, rtol=1e-3, atol=1e-3), (
        float(jnp.max(jnp.abs(out - ref))))

    print("KERNEL_OK")
</pallas_src>

<mosaic_0001>
module attributes {stable_mosaic.version = 11 : i64} {
  func.func @kernel(%arg0: i32, %arg1: memref<1x8x512xf32, #tpu.memory_space<vmem>>, %arg2: memref<8x72xf32, #tpu.memory_space<vmem>>, %arg3: memref<8x72xf32, #tpu.memory_space<vmem>>, %arg4: memref<1x8x512xf32, #tpu.memory_space<vmem>>, %arg5: memref<72x512xf32, #tpu.memory_space<vmem>>) attributes {dimension_semantics = [#tpu.dimension_semantics<parallel>], iteration_bounds = array<i64: 1>, scalar_prefetch = 0 : i64, scratch_operands = 1 : i64, tpu.core_type = #tpu.core_type<tc>, window_params = [{transform_indices = @transform_0, window_bounds = array<i64: 1, 8, 512>}, {pipeline_mode = #tpu.pipeline_mode<synchronous>, transform_indices = @transform_1, window_bounds = array<i64: 8, 72>}, {pipeline_mode = #tpu.pipeline_mode<synchronous>, transform_indices = @transform_2, window_bounds = array<i64: 8, 72>}, {transform_indices = @transform_3, window_bounds = array<i64: 1, 8, 512>}]} {
    %c0 = arith.constant 0 : index
    %c0_0 = arith.constant 0 : index
    %c0_1 = arith.constant 0 : index
    %0 = vector.load %arg1[%c0, %c0_0, %c0_1] : memref<1x8x512xf32, #tpu.memory_space<vmem>>, vector<1x8x512xf32>
    %1 = vector.shape_cast %0 : vector<1x8x512xf32> to vector<8x512xf32>
    %2 = tpu.iota {dimensions = array<i32: 1>} : vector<1x512xi32>
    %c255_i32 = arith.constant 255 : i32
    %3 = vector.broadcast %c255_i32 : i32 to vector<1x512xi32>
    %4 = arith.andi %2, %3 : vector<1x512xi32>
    %c15_i32 = arith.constant 15 : i32
    %5 = vector.broadcast %c15_i32 : i32 to vector<1x512xi32>
    %6 = arith.andi %4, %5 : vector<1x512xi32>
    %c4_i32 = arith.constant 4 : i32
    %7 = vector.broadcast %c4_i32 : i32 to vector<1x512xi32>
    %8 = arith.shrsi %4, %7 : vector<1x512xi32>
    %c8_i32 = arith.constant 8 : i32
    %9 = vector.broadcast %c8_i32 : i32 to vector<1x512xi32>
    %10 = arith.shrsi %2, %9 : vector<1x512xi32>
    %c1_i32 = arith.constant 1 : i32
    %11 = vector.broadcast %c1_i32 : i32 to vector<1x512xi32>
    %12 = arith.cmpi sge, %6, %11 : vector<1x512xi32>
    %cst = arith.constant 1.000000e+00 : f32
    %cst_2 = arith.constant 0.000000e+00 : f32
    %13 = vector.broadcast %cst : f32 to vector<1x512xf32>
    %14 = vector.broadcast %cst_2 : f32 to vector<1x512xf32>
    %15 = arith.select %12, %13, %14 : vector<1x512xi1>, vector<1x512xf32>
    %c14_i32 = arith.constant 14 : i32
    %16 = vector.broadcast %c14_i32 : i32 to vector<1x512xi32>
    %17 = arith.cmpi sle, %6, %16 : vector<1x512xi32>
    %cst_3 = arith.constant 1.000000e+00 : f32
    %cst_4 = arith.constant 0.000000e+00 : f32
    %18 = vector.broadcast %cst_3 : f32 to vector<1x512xf32>
    %19 = vector.broadcast %cst_4 : f32 to vector<1x512xf32>
    %20 = arith.select %17, %18, %19 : vector<1x512xi1>, vector<1x512xf32>
    %c1_i32_5 = arith.constant 1 : i32
    %21 = vector.broadcast %c1_i32_5 : i32 to vector<1x512xi32>
    %22 = arith.cmpi sge, %8, %21 : vector<1x512xi32>
    %cst_6 = arith.constant 1.000000e+00 : f32
    %cst_7 = arith.constant 0.000000e+00 : f32
    %23 = vector.broadcast %cst_6 : f32 to vector<1x512xf32>
    %24 = vector.broadcast %cst_7 : f32 to vector<1x512xf32>
    %25 = arith.select %22, %23, %24 : vector<1x512xi1>, vector<1x512xf32>
    %c14_i32_8 = arith.constant 14 : i32
    %26 = vector.broadcast %c14_i32_8 : i32 to vector<1x512xi32>
    %27 = arith.cmpi sle, %8, %26 : vector<1x512xi32>
    %cst_9 = arith.constant 1.000000e+00 : f32
    %cst_10 = arith.constant 0.000000e+00 : f32
    %28 = vector.broadcast %cst_9 : f32 to vector<1x512xf32>
    %29 = vector.broadcast %cst_10 : f32 to vector<1x512xf32>
    %30 = arith.select %27, %28, %29 : vector<1x512xi1>, vector<1x512xf32>
    %31 = arith.mulf %25, %15 : vector<1x512xf32>
    %32 = arith.mulf %25, %20 : vector<1x512xf32>
    %33 = arith.mulf %30, %15 : vector<1x512xf32>
    %34 = arith.mulf %30, %20 : vector<1x512xf32>
    %c0_i32 = arith.constant 0 : i32
    %35 = vector.broadcast %c0_i32 : i32 to vector<1x512xi32>
    %36 = arith.cmpi eq, %10, %35 : vector<1x512xi32>
    %cst_11 = arith.constant 1.000000e+00 : f32
    %cst_12 = arith.constant 0.000000e+00 : f32
    %37 = vector.broadcast %cst_11 : f32 to vector<1x512xf32>
    %38 = vector.broadcast %cst_12 : f32 to vector<1x512xf32>
    %39 = arith.select %36, %37, %38 : vector<1x512xi1>, vector<1x512xf32>
    %c1_i32_13 = arith.constant 1 : i32
    %40 = vector.broadcast %c1_i32_13 : i32 to vector<1x512xi32>
    %41 = arith.cmpi eq, %10, %40 : vector<1x512xi32>
    %cst_14 = arith.constant 1.000000e+00 : f32
    %cst_15 = arith.constant 0.000000e+00 : f32
    %42 = vector.broadcast %cst_14 : f32 to vector<1x512xf32>
    %43 = vector.broadcast %cst_15 : f32 to vector<1x512xf32>
    %44 = arith.select %41, %42, %43 : vector<1x512xi1>, vector<1x512xf32>
    %c17_i32 = arith.constant 17 : i32
    %45 = tpu.dynamic_rotate %1 by %c17_i32 dim 1 : vector<8x512xf32>, i32 -> vector<8x512xf32>
    %46 = vector.broadcast %31 : vector<1x512xf32> to vector<8x512xf32>
    %47 = arith.mulf %45, %46 : vector<8x512xf32>
    %c0_16 = arith.constant 0 : index
    %c0_17 = arith.constant 0 : index
    %48 = vector.load %arg5[%c0_16, %c0_17] : memref<72x512xf32, #tpu.memory_space<vmem>>, vector<8x512xf32>
    tpu.vector_store %arg5[%c0_16, %c0_17], %47 {strides = array<i32>} : memref<72x512xf32, #tpu.memory_space<vmem>>, vector<8x512xf32>,
    %c16_i32 = arith.constant 16 : i32
    %49 = tpu.dynamic_rotate %1 by %c16_i32 dim 1 : vector<8x512xf32>, i32 -> vector<8x512xf32>
    %50 = vector.broadcast %25 : vector<1x512xf32> to vector<8x512xf32>
    %51 = arith.mulf %49, %50 : vector<8x512xf32>
    %c8 = arith.constant 8 : index
    %c0_18 = arith.constant 0 : index
    %52 = vector.load %arg5[%c8, %c0_18] : memref<72x512xf32, #tpu.memory_space<vmem>>, vector<8x512xf32>
    tpu.vector_store %arg5[%c8, %c0_18], %51 {strides = array<i32>} : memref<72x512xf32, #tpu.memory_space<vmem>>, vector<8x512xf32>,
    %c15_i32_19 = arith.constant 15 : i32
    %53 = tpu.dynamic_rotate %1 by %c15_i32_19 dim 1 : vector<8x512xf32>, i32 -> vector<8x512xf32>
    %54 = vector.broadcast %32 : vector<1x512xf32> to vector<8x512xf32>
    %55 = arith.mulf %53, %54 : vector<8x512xf32>
    %c16 = arith.constant 16 : index
    %c0_20 = arith.constant 0 : index
    %56 = vector.load %arg5[%c16, %c0_20] : memref<72x512xf32, #tpu.memory_space<vmem>>, vector<8x512xf32>
    tpu.vector_store %arg5[%c16, %c0_20], %55 {strides = array<i32>} : memref<72x512xf32, #tpu.memory_space<vmem>>, vector<8x512xf32>,
    %c1_i32_21 = arith.constant 1 : i32
    %57 = tpu.dynamic_rotate %1 by %c1_i32_21 dim 1 : vector<8x512xf32>, i32 -> vector<8x512xf32>
    %58 = vector.broadcast %15 : vector<1x512xf32> to vector<8x512xf32>
    %59 = arith.mulf %57, %58 : vector<8x512xf32>
    %c24 = arith.constant 24 : index
    %c0_22 = arith.constant 0 : index
    %60 = vector.load %arg5[%c24, %c0_22] : memref<72x512xf32, #tpu.memory_space<vmem>>, vector<8x512xf32>
    tpu.vector_store %arg5[%c24, %c0_22], %59 {strides = array<i32>} : memref<72x512xf32, #tpu.memory_space<vmem>>, vector<8x512xf32>,
    %c32 = arith.constant 32 : index
    %c0_23 = arith.constant 0 : index
    %61 = vector.load %arg5[%c32, %c0_23] : memref<72x512xf32, #tpu.memory_space<vmem>>, vector<8x512xf32>
    tpu.vector_store %arg5[%c32, %c0_23], %1 {strides = array<i32>} : memref<72x512xf32, #tpu.memory_space<vmem>>, vector<8x512xf32>,
    %c511_i32 = arith.constant 511 : i32
    %62 = tpu.dynamic_rotate %1 by %c511_i32 dim 1 : vector<8x512xf32>, i32 -> vector<8x512xf32>
    %63 = vector.broadcast %20 : vector<1x512xf32> to vector<8x512xf32>
    %64 = arith.mulf %62, %63 : vector<8x512xf32>
    %c40 = arith.constant 40 : index
    %c0_24 = arith.constant 0 : index
    %65 = vector.load %arg5[%c40, %c0_24] : memref<72x512xf32, #tpu.memory_space<vmem>>, vector<8x512xf32>
    tpu.vector_store %arg5[%c40, %c0_24], %64 {strides = array<i32>} : memref<72x512xf32, #tpu.memory_space<vmem>>, vector<8x512xf32>,
    %c497_i32 = arith.constant 497 : i32
    %66 = tpu.dynamic_rotate %1 by %c497_i32 dim 1 : vector<8x512xf32>, i32 -> vector<8x512xf32>
    %67 = vector.broadcast %33 : vector<1x512xf32> to vector<8x512xf32>
    %68 = arith.mulf %66, %67 : vector<8x512xf32>
    %c48 = arith.constant 48 : index
    %c0_25 = arith.constant 0 : index
    %69 = vector.load %arg5[%c48, %c0_25] : memref<72x512xf32, #tpu.memory_space<vmem>>, vector<8x512xf32>
    tpu.vector_store %arg5[%c48, %c0_25], %68 {strides = array<i32>} : memref<72x512xf32, #tpu.memory_space<vmem>>, vector<8x512xf32>,
    %c496_i32 = arith.constant 496 : i32
    %70 = tpu.dynamic_rotate %1 by %c496_i32 dim 1 : vector<8x512xf32>, i32 -> vector<8x512xf32>
    %71 = vector.broadcast %30 : vector<1x512xf32> to vector<8x512xf32>
    %72 = arith.mulf %70, %71 : vector<8x512xf32>
    %c56 = arith.constant 56 : index
    %c0_26 = arith.constant 0 : index
    %73 = vector.load %arg5[%c56, %c0_26] : memref<72x512xf32, #tpu.memory_space<vmem>>, vector<8x512xf32>
    tpu.vector_store %arg5[%c56, %c0_26], %72 {strides = array<i32>} : memref<72x512xf32, #tpu.memory_space<vmem>>, vector<8x512xf32>,
    %c495_i32 = arith.constant 495 : i32
    %74 = tpu.dynamic_rotate %1 by %c495_i32 dim 1 : vector<8x512xf32>, i32 -> vector<8x512xf32>
    %75 = vector.broadcast %34 : vector<1x512xf32> to vector<8x512xf32>
    %76 = arith.mulf %74, %75 : vector<8x512xf32>
    %c64 = arith.constant 64 : index
    %c0_27 = arith.constant 0 : index
    %77 = vector.load %arg5[%c64, %c0_27] : memref<72x512xf32, #tpu.memory_space<vmem>>, vector<8x512xf32>
    tpu.vector_store %arg5[%c64, %c0_27], %76 {strides = array<i32>} : memref<72x512xf32, #tpu.memory_space<vmem>>, vector<8x512xf32>,
    %c0_28 = arith.constant 0 : index
    %c0_29 = arith.constant 0 : index
    %78 = vector.load %arg2[%c0_28, %c0_29] : memref<8x72xf32, #tpu.memory_space<vmem>>, vector<8x72xf32>
    %c0_30 = arith.constant 0 : index
    %c0_31 = arith.constant 0 : index
    %79 = vector.load %arg5[%c0_30, %c0_31] : memref<72x512xf32, #tpu.memory_space<vmem>>, vector<72x512xf32>
    %cst_32 = arith.constant dense<0.000000e+00> : vector<8x512xf32>
    %80 = tpu.matmul %78, %79, %cst_32 {dimension_numbers = #tpu.dot_dimension_numbers<[1], [0], [0], [1], [0, 0, 1, 1], [], []>} : vector<8x72xf32>, vector<72x512xf32>, vector<8x512xf32> -> vector<8x512xf32>
    %81 = vector.broadcast %39 : vector<1x512xf32> to vector<8x512xf32>
    %82 = arith.mulf %80, %81 : vector<8x512xf32>
    %cst_33 = arith.constant dense<0.000000e+00> : vector<8xf32>
    %83 = vector.multi_reduction <add>, %82, %cst_33 [1] : vector<8x512xf32> to vector<8xf32>
    %84 = vector.shape_cast %83 : vector<8xf32> to vector<8x1xf32>
    %cst_34 = arith.constant 3.906250e-03 : f32
    %85 = vector.broadcast %cst_34 : f32 to vector<8x1xf32>
    %86 = arith.mulf %84, %85 : vector<8x1xf32>
    %87 = vector.broadcast %86 : vector<8x1xf32> to vector<8x512xf32>
    %88 = vector.broadcast %39 : vector<1x512xf32> to vector<8x512xf32>
    %89 = arith.mulf %87, %88 : vector<8x512xf32>
    %90 = vector.broadcast %44 : vector<1x512xf32> to vector<8x512xf32>
    %91 = arith.mulf %80, %90 : vector<8x512xf32>
    %cst_35 = arith.constant dense<0.000000e+00> : vector<8xf32>
    %92 = vector.multi_reduction <add>, %91, %cst_35 [1] : vector<8x512xf32> to vector<8xf32>
    %93 = vector.shape_cast %92 : vector<8xf32> to vector<8x1xf32>
    %cst_36 = arith.constant 3.906250e-03 : f32
    %94 = vector.broadcast %cst_36 : f32 to vector<8x1xf32>
    %95 = arith.mulf %93, %94 : vector<8x1xf32>
    %96 = vector.broadcast %95 : vector<8x1xf32> to vector<8x512xf32>
    %97 = vector.broadcast %44 : vector<1x512xf32> to vector<8x512xf32>
    %98 = arith.mulf %96, %97 : vector<8x512xf32>
    %99 = arith.addf %89, %98 : vector<8x512xf32>
    %100 = arith.subf %80, %99 : vector<8x512xf32>
    %101 = arith.mulf %100, %100 : vector<8x512xf32>
    %102 = vector.broadcast %39 : vector<1x512xf32> to vector<8x512xf32>
    %103 = arith.mulf %101, %102 : vector<8x512xf32>
    %cst_37 = arith.constant dense<0.000000e+00> : vector<8xf32>
    %104 = vector.multi_reduction <add>, %103, %cst_37 [1] : vector<8x512xf32> to vector<8xf32>
    %105 = vector.shape_cast %104 : vector<8xf32> to vector<8x1xf32>
    %cst_38 = arith.constant 3.906250e-03 : f32
    %106 = vector.broadcast %cst_38 : f32 to vector<8x1xf32>
    %107 = arith.mulf %105, %106 : vector<8x1xf32>
    %cst_39 = arith.constant 9.99999974E-6 : f32
    %108 = vector.broadcast %cst_39 : f32 to vector<8x1xf32>
    %109 = arith.addf %107, %108 : vector<8x1xf32>
    %110 = math.rsqrt %109 : vector<8x1xf32>
    %111 = vector.broadcast %110 : vector<8x1xf32> to vector<8x512xf32>
    %112 = vector.broadcast %39 : vector<1x512xf32> to vector<8x512xf32>
    %113 = arith.mulf %111, %112 : vector<8x512xf32>
    %114 = arith.mulf %100, %100 : vector<8x512xf32>
    %115 = vector.broadcast %44 : vector<1x512xf32> to vector<8x512xf32>
    %116 = arith.mulf %114, %115 : vector<8x512xf32>
    %cst_40 = arith.constant dense<0.000000e+00> : vector<8xf32>
    %117 = vector.multi_reduction <add>, %116, %cst_40 [1] : vector<8x512xf32> to vector<8xf32>
    %118 = vector.shape_cast %117 : vector<8xf32> to vector<8x1xf32>
    %cst_41 = arith.constant 3.906250e-03 : f32
    %119 = vector.broadcast %cst_41 : f32 to vector<8x1xf32>
    %120 = arith.mulf %118, %119 : vector<8x1xf32>
    %cst_42 = arith.constant 9.99999974E-6 : f32
    %121 = vector.broadcast %cst_42 : f32 to vector<8x1xf32>
    %122 = arith.addf %120, %121 : vector<8x1xf32>
    %123 = math.rsqrt %122 : vector<8x1xf32>
    %124 = vector.broadcast %123 : vector<8x1xf32> to vector<8x512xf32>
    %125 = vector.broadcast %44 : vector<1x512xf32> to vector<8x512xf32>
    %126 = arith.mulf %124, %125 : vector<8x512xf32>
    %127 = arith.addf %113, %126 : vector<8x512xf32>
    %128 = arith.mulf %100, %127 : vector<8x512xf32>
    %cst_43 = arith.constant 0.000000e+00 : f32
    %129 = vector.broadcast %cst_43 : f32 to vector<8x512xf32>
    %130 = arith.cmpf oge, %128, %129 : vector<8x512xf32>
    %cst_44 = arith.constant 0.00999999977 : f32
    %131 = vector.broadcast %cst_44 : f32 to vector<8x512xf32>
    %132 = arith.mulf %131, %128 : vector<8x512xf32>
    %133 = arith.select %130, %128, %132 : vector<8x512xi1>, vector<8x512xf32>
    %c17_i32_45 = arith.constant 17 : i32
    %134 = tpu.dynamic_rotate %133 by %c17_i32_45 dim 1 : vector<8x512xf32>, i32 -> vector<8x512xf32>
    %135 = vector.broadcast %31 : vector<1x512xf32> to vector<8x512xf32>
    %136 = arith.mulf %134, %135 : vector<8x512xf32>
    %c0_46 = arith.constant 0 : index
    %c0_47 = arith.constant 0 : index
    %137 = vector.load %arg5[%c0_46, %c0_47] : memref<72x512xf32, #tpu.memory_space<vmem>>, vector<8x512xf32>
    tpu.vector_store %arg5[%c0_46, %c0_47], %136 {strides = array<i32>} : memref<72x512xf32, #tpu.memory_space<vmem>>, vector<8x512xf32>,
    %c16_i32_48 = arith.constant 16 : i32
    %138 = tpu.dynamic_rotate %133 by %c16_i32_48 dim 1 : vector<8x512xf32>, i32 -> vector<8x512xf32>
    %139 = vector.broadcast %25 : vector<1x512xf32> to vector<8x512xf32>
    %140 = arith.mulf %138, %139 : vector<8x512xf32>
    %c8_49 = arith.constant 8 : index
    %c0_50 = arith.constant 0 : index
    %141 = vector.load %arg5[%c8_49, %c0_50] : memref<72x512xf32, #tpu.memory_space<vmem>>, vector<8x512xf32>
    tpu.vector_store %arg5[%c8_49, %c0_50], %140 {strides = array<i32>} : memref<72x512xf32, #tpu.memory_space<vmem>>, vector<8x512xf32>,
    %c15_i32_51 = arith.constant 15 : i32
    %142 = tpu.dynamic_rotate %133 by %c15_i32_51 dim 1 : vector<8x512xf32>, i32 -> vector<8x512xf32>
    %143 = vector.broadcast %32 : vector<1x512xf32> to vector<8x512xf32>
    %144 = arith.mulf %142, %143 : vector<8x512xf32>
    %c16_52 = arith.constant 16 : index
    %c0_53 = arith.constant 0 : index
    %145 = vector.load %arg5[%c16_52, %c0_53] : memref<72x512xf32, #tpu.memory_space<vmem>>, vector<8x512xf32>
    tpu.vector_store %arg5[%c16_52, %c0_53], %144 {strides = array<i32>} : memref<72x512xf32, #tpu.memory_space<vmem>>, vector<8x512xf32>,
    %c1_i32_54 = arith.constant 1 : i32
    %146 = tpu.dynamic_rotate %133 by %c1_i32_54 dim 1 : vector<8x512xf32>, i32 -> vector<8x512xf32>
    %147 = vector.broadcast %15 : vector<1x512xf32> to vector<8x512xf32>
    %148 = arith.mulf %146, %147 : vector<8x512xf32>
    %c24_55 = arith.constant 24 : index
    %c0_56 = arith.constant 0 : index
    %149 = vector.load %arg5[%c24_55, %c0_56] : memref<72x512xf32, #tpu.memory_space<vmem>>, vector<8x512xf32>
    tpu.vector_store %arg5[%c24_55, %c0_56], %148 {strides = array<i32>} : memref<72x512xf32, #tpu.memory_space<vmem>>, vector<8x512xf32>,
    %c32_57 = arith.constant 32 : index
    %c0_58 = arith.constant 0 : index
    %150 = vector.load %arg5[%c32_57, %c0_58] : memref<72x512xf32, #tpu.memory_space<vmem>>, vector<8x512xf32>
    tpu.vector_store %arg5[%c32_57, %c0_58], %133 {strides = array<i32>} : memref<72x512xf32, #tpu.memory_space<vmem>>, vector<8x512xf32>,
    %c511_i32_59 = arith.constant 511 : i32
    %151 = tpu.dynamic_rotate %133 by %c511_i32_59 dim 1 : vector<8x512xf32>, i32 -> vector<8x512xf32>
    %152 = vector.broadcast %20 : vector<1x512xf32> to vector<8x512xf32>
    %153 = arith.mulf %151, %152 : vector<8x512xf32>
    %c40_60 = arith.constant 40 : index
    %c0_61 = arith.constant 0 : index
    %154 = vector.load %arg5[%c40_60, %c0_61] : memref<72x512xf32, #tpu.memory_space<vmem>>, vector<8x512xf32>
    tpu.vector_store %arg5[%c40_60, %c0_61], %153 {strides = array<i32>} : memref<72x512xf32, #tpu.memory_space<vmem>>, vector<8x512xf32>,
    %c497_i32_62 = arith.constant 497 : i32
    %155 = tpu.dynamic_rotate %133 by %c497_i32_62 dim 1 : vector<8x512xf32>, i32 -> vector<8x512xf32>
    %156 = vector.broadcast %33 : vector<1x512xf32> to vector<8x512xf32>
    %157 = arith.mulf %155, %156 : vector<8x512xf32>
    %c48_63 = arith.constant 48 : index
    %c0_64 = arith.constant 0 : index
    %158 = vector.load %arg5[%c48_63, %c0_64] : memref<72x512xf32, #tpu.memory_space<vmem>>, vector<8x512xf32>
    tpu.vector_store %arg5[%c48_63, %c0_64], %157 {strides = array<i32>} : memref<72x512xf32, #tpu.memory_space<vmem>>, vector<8x512xf32>,
    %c496_i32_65 = arith.constant 496 : i32
    %159 = tpu.dynamic_rotate %133 by %c496_i32_65 dim 1 : vector<8x512xf32>, i32 -> vector<8x512xf32>
    %160 = vector.broadcast %30 : vector<1x512xf32> to vector<8x512xf32>
    %161 = arith.mulf %159, %160 : vector<8x512xf32>
    %c56_66 = arith.constant 56 : index
    %c0_67 = arith.constant 0 : index
    %162 = vector.load %arg5[%c56_66, %c0_67] : memref<72x512xf32, #tpu.memory_space<vmem>>, vector<8x512xf32>
    tpu.vector_store %arg5[%c56_66, %c0_67], %161 {strides = array<i32>} : memref<72x512xf32, #tpu.memory_space<vmem>>, vector<8x512xf32>,
    %c495_i32_68 = arith.constant 495 : i32
    %163 = tpu.dynamic_rotate %133 by %c495_i32_68 dim 1 : vector<8x512xf32>, i32 -> vector<8x512xf32>
    %164 = vector.broadcast %34 : vector<1x512xf32> to vector<8x512xf32>
    %165 = arith.mulf %163, %164 : vector<8x512xf32>
    %c64_69 = arith.constant 64 : index
    %c0_70 = arith.constant 0 : index
    %166 = vector.load %arg5[%c64_69, %c0_70] : memref<72x512xf32, #tpu.memory_space<vmem>>, vector<8x512xf32>
    tpu.vector_store %arg5[%c64_69, %c0_70], %165 {strides = array<i32>} : memref<72x512xf32, #tpu.memory_space<vmem>>, vector<8x512xf32>,
    %c0_71 = arith.constant 0 : index
    %c0_72 = arith.constant 0 : index
    %167 = vector.load %arg3[%c0_71, %c0_72] : memref<8x72xf32, #tpu.memory_space<vmem>>, vector<8x72xf32>
    %c0_73 = arith.constant 0 : index
    %c0_74 = arith.constant 0 : index
    %168 = vector.load %arg5[%c0_73, %c0_74] : memref<72x512xf32, #tpu.memory_space<vmem>>, vector<72x512xf32>
    %cst_75 = arith.constant dense<0.000000e+00> : vector<8x512xf32>
    %169 = tpu.matmul %167, %168, %cst_75 {dimension_numbers = #tpu.dot_dimension_numbers<[1], [0], [0], [1], [0, 0, 1, 1], [], []>} : vector<8x72xf32>, vector<72x512xf32>, vector<8x512xf32> -> vector<8x512xf32>
    %170 = vector.broadcast %39 : vector<1x512xf32> to vector<8x512xf32>
    %171 = arith.mulf %169, %170 : vector<8x512xf32>
    %cst_76 = arith.constant dense<0.000000e+00> : vector<8xf32>
    %172 = vector.multi_reduction <add>, %171, %cst_76 [1] : vector<8x512xf32> to vector<8xf32>
    %173 = vector.shape_cast %172 : vector<8xf32> to vector<8x1xf32>
    %cst_77 = arith.constant 3.906250e-03 : f32
    %174 = vector.broadcast %cst_77 : f32 to vector<8x1xf32>
    %175 = arith.mulf %173, %174 : vector<8x1xf32>
    %176 = vector.broadcast %175 : vector<8x1xf32> to vector<8x512xf32>
    %177 = vector.broadcast %39 : vector<1x512xf32> to vector<8x512xf32>
    %178 = arith.mulf %176, %177 : vector<8x512xf32>
    %179 = vector.broadcast %44 : vector<1x512xf32> to vector<8x512xf32>
    %180 = arith.mulf %169, %179 : vector<8x512xf32>
    %cst_78 = arith.constant dense<0.000000e+00> : vector<8xf32>
    %181 = vector.multi_reduction <add>, %180, %cst_78 [1] : vector<8x512xf32> to vector<8xf32>
    %182 = vector.shape_cast %181 : vector<8xf32> to vector<8x1xf32>
    %cst_79 = arith.constant 3.906250e-03 : f32
    %183 = vector.broadcast %cst_79 : f32 to vector<8x1xf32>
    %184 = arith.mulf %182, %183 : vector<8x1xf32>
    %185 = vector.broadcast %184 : vector<8x1xf32> to vector<8x512xf32>
    %186 = vector.broadcast %44 : vector<1x512xf32> to vector<8x512xf32>
    %187 = arith.mulf %185, %186 : vector<8x512xf32>
    %188 = arith.addf %178, %187 : vector<8x512xf32>
    %189 = arith.subf %169, %188 : vector<8x512xf32>
    %190 = arith.mulf %189, %189 : vector<8x512xf32>
    %191 = vector.broadcast %39 : vector<1x512xf32> to vector<8x512xf32>
    %192 = arith.mulf %190, %191 : vector<8x512xf32>
    %cst_80 = arith.constant dense<0.000000e+00> : vector<8xf32>
    %193 = vector.multi_reduction <add>, %192, %cst_80 [1] : vector<8x512xf32> to vector<8xf32>
    %194 = vector.shape_cast %193 : vector<8xf32> to vector<8x1xf32>
    %cst_81 = arith.constant 3.906250e-03 : f32
    %195 = vector.broadcast %cst_81 : f32 to vector<8x1xf32>
    %196 = arith.mulf %194, %195 : vector<8x1xf32>
    %cst_82 = arith.constant 9.99999974E-6 : f32
    %197 = vector.broadcast %cst_82 : f32 to vector<8x1xf32>
    %198 = arith.addf %196, %197 : vector<8x1xf32>
    %199 = math.rsqrt %198 : vector<8x1xf32>
    %200 = vector.broadcast %199 : vector<8x1xf32> to vector<8x512xf32>
    %201 = vector.broadcast %39 : vector<1x512xf32> to vector<8x512xf32>
    %202 = arith.mulf %200, %201 : vector<8x512xf32>
    %203 = arith.mulf %189, %189 : vector<8x512xf32>
    %204 = vector.broadcast %44 : vector<1x512xf32> to vector<8x512xf32>
    %205 = arith.mulf %203, %204 : vector<8x512xf32>
    %cst_83 = arith.constant dense<0.000000e+00> : vector<8xf32>
    %206 = vector.multi_reduction <add>, %205, %cst_83 [1] : vector<8x512xf32> to vector<8xf32>
    %207 = vector.shape_cast %206 : vector<8xf32> to vector<8x1xf32>
    %cst_84 = arith.constant 3.906250e-03 : f32
    %208 = vector.broadcast %cst_84 : f32 to vector<8x1xf32>
    %209 = arith.mulf %207, %208 : vector<8x1xf32>
    %cst_85 = arith.constant 9.99999974E-6 : f32
    %210 = vector.broadcast %cst_85 : f32 to vector<8x1xf32>
    %211 = arith.addf %209, %210 : vector<8x1xf32>
    %212 = math.rsqrt %211 : vector<8x1xf32>
    %213 = vector.broadcast %212 : vector<8x1xf32> to vector<8x512xf32>
    %214 = vector.broadcast %44 : vector<1x512xf32> to vector<8x512xf32>
    %215 = arith.mulf %213, %214 : vector<8x512xf32>
    %216 = arith.addf %202, %215 : vector<8x512xf32>
    %217 = arith.mulf %189, %216 : vector<8x512xf32>
    %218 = arith.addf %217, %1 : vector<8x512xf32>
    %cst_86 = arith.constant 0.000000e+00 : f32
    %219 = vector.broadcast %cst_86 : f32 to vector<8x512xf32>
    %220 = arith.cmpf oge, %218, %219 : vector<8x512xf32>
    %cst_87 = arith.constant 0.00999999977 : f32
    %221 = vector.broadcast %cst_87 : f32 to vector<8x512xf32>
    %222 = arith.mulf %221, %218 : vector<8x512xf32>
    %223 = arith.select %220, %218, %222 : vector<8x512xi1>, vector<8x512xf32>
    %224 = vector.shape_cast %223 : vector<8x512xf32> to vector<1x8x512xf32>
    %c0_88 = arith.constant 0 : index
    %c0_89 = arith.constant 0 : index
    %c0_90 = arith.constant 0 : index
    %225 = vector.load %arg4[%c0_88, %c0_89, %c0_90] : memref<1x8x512xf32, #tpu.memory_space<vmem>>, vector<1x8x512xf32>
    tpu.vector_store %arg4[%c0_88, %c0_89, %c0_90], %224 {strides = array<i32>} : memref<1x8x512xf32, #tpu.memory_space<vmem>>, vector<1x8x512xf32>,
    return
  }
  func.func @transform_0(%arg0: i32) -> (i32, i32, i32) {
    %c0_i32 = arith.constant 0 : i32
    %c0_i32_0 = arith.constant 0 : i32
    %c0_i32_1 = arith.constant 0 : i32
    return %arg0, %c0_i32, %c0_i32_0 : i32, i32, i32
  }
  func.func @transform_1(%arg0: i32) -> (i32, i32) {
    %c0_i32 = arith.constant 0 : i32
    %c0_i32_0 = arith.constant 0 : i32
    %c0_i32_1 = arith.constant 0 : i32
    return %c0_i32, %c0_i32_0 : i32, i32
  }
  func.func @transform_2(%arg0: i32) -> (i32, i32) {
    %c0_i32 = arith.constant 0 : i32
    %c0_i32_0 = arith.constant 0 : i32
    %c0_i32_1 = arith.constant 0 : i32
    return %c0_i32, %c0_i32_0 : i32, i32
  }
  func.func @transform_3(%arg0: i32) -> (i32, i32, i32) {
    %c0_i32 = arith.constant 0 : i32
    %c0_i32_0 = arith.constant 0 : i32
    %c0_i32_1 = arith.constant 0 : i32
    return %arg0, %c0_i32, %c0_i32_0 : i32, i32, i32
  }
}

</mosaic_0001>

<llo_original>
// kernel: tpu_custom_call.1
$region0: #{tpu_custom_call.1}
  #allocation0 [shape = 'u32[]', space=smem, size = 0x4, offset = 0x4, fixed_abs, tag = 'smem constant byte address 0x4 - core index']
  #allocation1 [shape = 'u32[144,128]{1,0:T(1,128)}', space=vmem, size = 0x12000, scoped, tag = 'internal scratch']
  #allocation2 [shape = 'f32[72,512]{1,0:T(8,128)}', space=vmem, size = 0x24000, scoped, tag = 'scratch operand']
  %s0 = inlined_call_operand.hbm [shape: f32[1,8,512], index: 0, kind: input, shape index: {}]
  %s1 = inlined_call_operand.hbm [shape: f32[8,72], index: 1, kind: input, shape index: {}]
  %s2 = inlined_call_operand.hbm [shape: f32[8,72], index: 2, kind: input, shape index: {}]
  %s3 = inlined_call_operand.hbm [shape: f32[1,8,512], index: 3, kind: output, shape index: {}]
  %s4 = sld [smem:[#allocation0]]
  $region34: #{tpu_custom_call.1} parent=0
    _
  %s6 = ssub.s32 1, %s4
  %s7 = scalar_select 0, %s6, %s4
  $region1: #{tpu_custom_call.1} parent=0
    #allocation3 [shape = 'u8[16384]{0}', space=vmem, size = 0x4000, scoped, tag = 'input window, operand 0, single buffered']
    #allocation4 [shape = 's32[1]{0}', space=sflag, size = 0x4, scoped, tag = 'scoped memory for tpu_custom_call.1']
    #allocation5 [shape = 's32[1]{0}', space=sflag, size = 0x4, scoped, tag = 'scoped memory for tpu_custom_call.1']
    #allocation6 [shape = 'u8[4096]{0}', space=vmem, size = 0x1000, scoped, tag = 'input window, operand 1, single buffered']
    #allocation7 [shape = 's32[1]{0}', space=sflag, size = 0x4, scoped, tag = 'scoped memory for tpu_custom_call.1']
    #allocation8 [shape = 'u8[4096]{0}', space=vmem, size = 0x1000, scoped, tag = 'input window, operand 2, single buffered']
    #allocation9 [shape = 'u8[16384]{0}', space=vmem, size = 0x4000, scoped, tag = 'output window, operand 0, single buffered']
    %8 = vsyncpa [#allocation4], 0
    %9 = vsyncpa [#allocation7], 0
    %10 = vsyncpa [#allocation5], 0
    // Predicated region
    $region2: #{tpu_custom_call.1} parent=1 // pred_check
      _
    $region3: #{tpu_custom_call.1} parent=1 // pred_check_branch
      %12 = sbr.rel (0) target = $region5
    $region4: #{tpu_custom_call.1} parent=1 // pred_region
      %s14 = ssub.s32 512, 512
      %15 = vsyncadd [#allocation4], %s14
      %s17 = sshll.u32 [#allocation3], 4
      %s18 = int_to_ptr.vmem [resolvable:$true] %s17
      %20 = dma.hbm_to_vmem [thread:$0]  %s0, 512, %s18, [#allocation4]
    $region5: #{tpu_custom_call.1} parent=1 // pred_fallthru
      _
    // Predicated region
    $region6: #{tpu_custom_call.1} parent=1 // pred_check
      _
    $region7: #{tpu_custom_call.1} parent=1 // pred_check_branch
      %22 = sbr.rel (0) target = $region9
    $region8: #{tpu_custom_call.1} parent=1 // pred_region
      %s24 = ssub.s32 128, 128
      %25 = vsyncadd [#allocation7], %s24
      %s27 = sshll.u32 [#allocation6], 4
      %s28 = int_to_ptr.vmem [resolvable:$true] %s27
      %30 = dma.hbm_to_vmem [thread:$0]  %s1, 128, %s28, [#allocation7]
    $region9: #{tpu_custom_call.1} parent=1 // pred_fallthru
      _
    // Predicated region
    $region10: #{tpu_custom_call.1} parent=1 // pred_check
      _
    $region11: #{tpu_custom_call.1} parent=1 // pred_check_branch
      %32 = sbr.rel (0) target = $region13
    $region12: #{tpu_custom_call.1} parent=1 // pred_region
      %s34 = ssub.s32 128, 128
      %35 = vsyncadd [#allocation7], %s34
      %s37 = sshll.u32 [#allocation8], 4
      %s38 = int_to_ptr.vmem [resolvable:$true] %s37
      %40 = dma.hbm_to_vmem [thread:$0]  %s2, 128, %s38, [#allocation7]
    $region13: #{tpu_custom_call.1} parent=1 // pred_fallthru
      _
    // Predicated region
    $region14: #{tpu_custom_call.1} parent=1 // pred_check
      _
    $region15: #{tpu_custom_call.1} parent=1 // pred_check_branch
      %42 = sbr.rel (0) target = $region17
    $region16: #{tpu_custom_call.1} parent=1 // pred_region
      %43 = dma.done [#allocation4], 512
    $region17: #{tpu_custom_call.1} parent=1 // pred_fallthru
      _
    // Predicated region
    $region18: #{tpu_custom_call.1} parent=1 // pred_check
      _
    $region19: #{tpu_custom_call.1} parent=1 // pred_check_branch
      %45 = sbr.rel (0) target = $region21
    $region20: #{tpu_custom_call.1} parent=1 // pred_region
      %46 = dma.done [#allocation7], 128
    $region21: #{tpu_custom_call.1} parent=1 // pred_fallthru
      _
    // Predicated region
    $region22: #{tpu_custom_call.1} parent=1 // pred_check
      _
    $region23: #{tpu_custom_call.1} parent=1 // pred_check_branch
      %48 = sbr.rel (0) target = $region25
    $region24: #{tpu_custom_call.1} parent=1 // pred_region
      %49 = dma.done [#allocation7], 128
    $region25: #{tpu_custom_call.1} parent=1 // pred_fallthru
      _
    %v50 = vld [vmem:[#allocation3] sm:$0xff]
    %v51 = vld [vmem:[#allocation3 + $0x8] sm:$0xff]
    %v52 = vld [vmem:[#allocation3 + $0x10] sm:$0xff]
    %v53 = vld [vmem:[#allocation3 + $0x18] sm:$0xff]
    %v54 = vlaneseq
    %v55 = vand.u32 %v54, 127
    %v56 = vadd.s32 %v55, 128
    %v57 = vadd.s32 %v55, 256
    %v58 = vadd.s32 %v55, 384
    %v59 = vand.u32 %v55, 255
    %v60 = vand.u32 %v56, 255
    %v61 = vand.u32 %v57, 255
    %v62 = vand.u32 %v58, 255
    %v63 = vand.u32 %v59, 15
    %v64 = vand.u32 %v60, 15
    %v65 = vand.u32 %v61, 15
    %v66 = vand.u32 %v62, 15
    %v67 = vshra.s32 %v59, 4
    %v68 = vshra.s32 %v60, 4
    %v69 = vshra.s32 %v61, 4
    %v70 = vshra.s32 %v62, 4
    %v71 = vshra.s32 %v55, 8
    %v72 = vshra.s32 %v56, 8
    %v73 = vshra.s32 %v57, 8
    %v74 = vshra.s32 %v58, 8
    %vm75 = vcmp.ge.s32.totalorder %v63, 1
    %vm76 = vcmp.ge.s32.totalorder %v64, 1
    %vm77 = vcmp.ge.s32.totalorder %v65, 1
    %vm78 = vcmp.ge.s32.totalorder %v66, 1
    %v79 = vsel %vm75, 1.0, 0.0
    %v80 = vsel %vm76, 1.0, 0.0
    %v81 = vsel %vm77, 1.0, 0.0
    %v82 = vsel %vm78, 1.0, 0.0
    %vm83 = vcmp.le.s32.totalorder %v63, 14
    %vm84 = vcmp.le.s32.totalorder %v64, 14
    %vm85 = vcmp.le.s32.totalorder %v65, 14
    %vm86 = vcmp.le.s32.totalorder %v66, 14
    %v87 = vsel %vm83, 1.0, 0.0
    %v88 = vsel %vm84, 1.0, 0.0
    %v89 = vsel %vm85, 1.0, 0.0
    %v90 = vsel %vm86, 1.0, 0.0
    %vm91 = vcmp.ge.s32.totalorder %v67, 1
    %vm92 = vcmp.ge.s32.totalorder %v68, 1
    %vm93 = vcmp.ge.s32.totalorder %v69, 1
    %vm94 = vcmp.ge.s32.totalorder %v70, 1
    %v95 = vsel %vm91, 1.0, 0.0
    %v96 = vsel %vm92, 1.0, 0.0
    %v97 = vsel %vm93, 1.0, 0.0
    %v98 = vsel %vm94, 1.0, 0.0
    %vm99 = vcmp.le.s32.totalorder %v67, 14
    %vm100 = vcmp.le.s32.totalorder %v68, 14
    %vm101 = vcmp.le.s32.totalorder %v69, 14
    %vm102 = vcmp.le.s32.totalorder %v70, 14
    %v103 = vsel %vm99, 1.0, 0.0
    %v104 = vsel %vm100, 1.0, 0.0
    %v105 = vsel %vm101, 1.0, 0.0
    %v106 = vsel %vm102, 1.0, 0.0
    %v107 = vmul.f32 %v95, %v79
    %v108 = vmul.f32 %v96, %v80
    %v109 = vmul.f32 %v97, %v81
    %v110 = vmul.f32 %v98, %v82
    %v111 = vmul.f32 %v95, %v87
    %v112 = vmul.f32 %v96, %v88
    %v113 = vmul.f32 %v97, %v89
    %v114 = vmul.f32 %v98, %v90
    %v115 = vmul.f32 %v103, %v79
    %v116 = vmul.f32 %v104, %v80
    %v117 = vmul.f32 %v105, %v81
    %v118 = vmul.f32 %v106, %v82
    %v119 = vmul.f32 %v103, %v87
    %v120 = vmul.f32 %v104, %v88
    %v121 = vmul.f32 %v105, %v89
    %v122 = vmul.f32 %v106, %v90
    %vm123 = vcmp.eq.s32.totalorder %v71, 0
    %vm124 = vcmp.eq.s32.totalorder %v72, 0
    %vm125 = vcmp.eq.s32.totalorder %v73, 0
    %vm126 = vcmp.eq.s32.totalorder %v74, 0
    %v127 = vsel %vm123, 1.0, 0.0
    %v128 = vsel %vm124, 1.0, 0.0
    %v129 = vsel %vm125, 1.0, 0.0
    %v130 = vsel %vm126, 1.0, 0.0
    %vm131 = vcmp.eq.s32.totalorder %v71, 1
    %vm132 = vcmp.eq.s32.totalorder %v72, 1
    %vm133 = vcmp.eq.s32.totalorder %v73, 1
    %vm134 = vcmp.eq.s32.totalorder %v74, 1
    %v135 = vsel %vm131, 1.0, 0.0
    %v136 = vsel %vm132, 1.0, 0.0
    %v137 = vsel %vm133, 1.0, 0.0
    %v138 = vsel %vm134, 1.0, 0.0
    %139 = vrot.lane.b32.xlu0 %v50, 17
    %v140 = vpop.permute.xlu0 %139
    %141 = vrot.lane.b32.xlu0 %v51, 17
    %v142 = vpop.permute.xlu0 %141
    %143 = vrot.lane.b32.xlu0 %v52, 17
    %v144 = vpop.permute.xlu0 %143
    %145 = vrot.lane.b32.xlu0 %v53, 17
    %v146 = vpop.permute.xlu0 %145
    %vm147 = vcmp.lt.s32.totalorder %v55, 17
    %v148 = vsel %vm147, %v144, %v146
    %v149 = vsel %vm147, %v142, %v144
    %v150 = vsel %vm147, %v140, %v142
    %v151 = vsel %vm147, %v146, %v140
    %v152 = vmul.f32 %v151, %v107
    %v153 = vmul.f32 %v150, %v108
    %v154 = vmul.f32 %v149, %v109
    %v155 = vmul.f32 %v148, %v110
    %156 = vst [vmem:[#allocation2] sm:$0xff] %v152
    %157 = vst [vmem:[#allocation2 + $0x8] sm:$0xff] %v153
    %158 = vst [vmem:[#allocation2 + $0x10] sm:$0xff] %v154
    %159 = vst [vmem:[#allocation2 + $0x18] sm:$0xff] %v155
    %160 = vrot.lane.b32.xlu0 %v50, 16
    %v161 = vpop.permute.xlu0 %160
    %162 = vrot.lane.b32.xlu0 %v51, 16
    %v163 = vpop.permute.xlu0 %162
    %164 = vrot.lane.b32.xlu0 %v52, 16
    %v165 = vpop.permute.xlu0 %164
    %166 = vrot.lane.b32.xlu0 %v53, 16
    %v167 = vpop.permute.xlu0 %166
    %vm168 = vcmp.lt.s32.totalorder %v55, 16
    %v169 = vsel %vm168, %v165, %v167
    %v170 = vsel %vm168, %v163, %v165
    %v171 = vsel %vm168, %v161, %v163
    %v172 = vsel %vm168, %v167, %v161
    %v173 = vmul.f32 %v172, %v95
    %v174 = vmul.f32 %v171, %v96
    %v175 = vmul.f32 %v170, %v97
    %v176 = vmul.f32 %v169, %v98
    %177 = vst [vmem:[#allocation2 + $0x20] sm:$0xff] %v173
    %178 = vst [vmem:[#allocation2 + $0x28] sm:$0xff] %v174
    %179 = vst [vmem:[#allocation2 + $0x30] sm:$0xff] %v175
    %180 = vst [vmem:[#allocation2 + $0x38] sm:$0xff] %v176
    %181 = vrot.lane.b32.xlu0 %v50, 15
    %v182 = vpop.permute.xlu0 %181
    %183 = vrot.lane.b32.xlu0 %v51, 15
    %v184 = vpop.permute.xlu0 %183
    %185 = vrot.lane.b32.xlu0 %v52, 15
    %v186 = vpop.permute.xlu0 %185
    %187 = vrot.lane.b32.xlu0 %v53, 15
    %v188 = vpop.permute.xlu0 %187
    %vm189 = vcmp.lt.s32.totalorder %v55, 15
    %v190 = vsel %vm189, %v186, %v188
    %v191 = vsel %vm189, %v184, %v186
    %v192 = vsel %vm189, %v182, %v184
    %v193 = vsel %vm189, %v188, %v182
    %v194 = vmul.f32 %v193, %v111
    %v195 = vmul.f32 %v192, %v112
    %v196 = vmul.f32 %v191, %v113
    %v197 = vmul.f32 %v190, %v114
    %198 = vst [vmem:[#allocation2 + $0x40] sm:$0xff] %v194
    %199 = vst [vmem:[#allocation2 + $0x48] sm:$0xff] %v195
    %200 = vst [vmem:[#allocation2 + $0x50] sm:$0xff] %v196
    %201 = vst [vmem:[#allocation2 + $0x58] sm:$0xff] %v197
    %202 = vrot.lane.b32.xlu0 %v50, 1
    %v203 = vpop.permute.xlu0 %202
    %204 = vrot.lane.b32.xlu0 %v51, 1
    %v205 = vpop.permute.xlu0 %204
    %206 = vrot.lane.b32.xlu0 %v52, 1
    %v207 = vpop.permute.xlu0 %206
    %208 = vrot.lane.b32.xlu0 %v53, 1
    %v209 = vpop.permute.xlu0 %208
    %vm210 = vcmp.lt.s32.totalorder %v55, 1
    %v211 = vsel %vm210, %v207, %v209
    %v212 = vsel %vm210, %v205, %v207
    %v213 = vsel %vm210, %v203, %v205
    %v214 = vsel %vm210, %v209, %v203
    %v215 = vmul.f32 %v214, %v79
    %v216 = vmul.f32 %v213, %v80
    %v217 = vmul.f32 %v212, %v81
    %v218 = vmul.f32 %v211, %v82
    %219 = vst [vmem:[#allocation2 + $0x60] sm:$0xff] %v215
    %220 = vst [vmem:[#allocation2 + $0x68] sm:$0xff] %v216
    %221 = vst [vmem:[#allocation2 + $0x70] sm:$0xff] %v217
    %222 = vst [vmem:[#allocation2 + $0x78] sm:$0xff] %v218
    %223 = vst [vmem:[#allocation2 + $0x80] sm:$0xff] %v50
    %224 = vst [vmem:[#allocation2 + $0x88] sm:$0xff] %v51
    %225 = vst [vmem:[#allocation2 + $0x90] sm:$0xff] %v52
    %226 = vst [vmem:[#allocation2 + $0x98] sm:$0xff] %v53
    %227 = vrot.lane.b32.xlu0 %v50, 127
    %v228 = vpop.permute.xlu0 %227
    %229 = vrot.lane.b32.xlu0 %v51, 127
    %v230 = vpop.permute.xlu0 %229
    %231 = vrot.lane.b32.xlu0 %v52, 127
    %v232 = vpop.permute.xlu0 %231
    %233 = vrot.lane.b32.xlu0 %v53, 127
    %v234 = vpop.permute.xlu0 %233
    %vm235 = vcmp.lt.s32.totalorder %v55, 127
    %v236 = vsel %vm235, %v232, %v234
    %v237 = vsel %vm235, %v230, %v232
    %v238 = vsel %vm235, %v228, %v230
    %v239 = vsel %vm235, %v234, %v228
    %v240 = vmul.f32 %v238, %v87
    %v241 = vmul.f32 %v237, %v88
    %v242 = vmul.f32 %v236, %v89
    %v243 = vmul.f32 %v239, %v90
    %244 = vst [vmem:[#allocation2 + $0xa0] sm:$0xff] %v240
    %245 = vst [vmem:[#allocation2 + $0xa8] sm:$0xff] %v241
    %246 = vst [vmem:[#allocation2 + $0xb0] sm:$0xff] %v242
    %247 = vst [vmem:[#allocation2 + $0xb8] sm:$0xff] %v243
    %248 = vrot.lane.b32.xlu0 %v50, 113
    %v249 = vpop.permute.xlu0 %248
    %250 = vrot.lane.b32.xlu0 %v51, 113
    %v251 = vpop.permute.xlu0 %250
    %252 = vrot.lane.b32.xlu0 %v52, 113
    %v253 = vpop.permute.xlu0 %252
    %254 = vrot.lane.b32.xlu0 %v53, 113
    %v255 = vpop.permute.xlu0 %254
    %vm256 = vcmp.lt.s32.totalorder %v55, 113
    %v257 = vsel %vm256, %v253, %v255
    %v258 = vsel %vm256, %v251, %v253
    %v259 = vsel %vm256, %v249, %v251
    %v260 = vsel %vm256, %v255, %v249
    %v261 = vmul.f32 %v259, %v115
    %v262 = vmul.f32 %v258, %v116
    %v263 = vmul.f32 %v257, %v117
    %v264 = vmul.f32 %v260, %v118
    %265 = vst [vmem:[#allocation2 + $0xc0] sm:$0xff] %v261
    %266 = vst [vmem:[#allocation2 + $0xc8] sm:$0xff] %v262
    %267 = vst [vmem:[#allocation2 + $0xd0] sm:$0xff] %v263
    %268 = vst [vmem:[#allocation2 + $0xd8] sm:$0xff] %v264
    %269 = vrot.lane.b32.xlu0 %v50, 112
    %v270 = vpop.permute.xlu0 %269
    %271 = vrot.lane.b32.xlu0 %v51, 112
    %v272 = vpop.permute.xlu0 %271
    %273 = vrot.lane.b32.xlu0 %v52, 112
    %v274 = vpop.permute.xlu0 %273
    %275 = vrot.lane.b32.xlu0 %v53, 112
    %v276 = vpop.permute.xlu0 %275
    %vm277 = vcmp.lt.s32.totalorder %v55, 112
    %v278 = vsel %vm277, %v274, %v276
    %v279 = vsel %vm277, %v272, %v274
    %v280 = vsel %vm277, %v270, %v272
    %v281 = vsel %vm277, %v276, %v270
    %v282 = vmul.f32 %v280, %v103
    %v283 = vmul.f32 %v279, %v104
    %v284 = vmul.f32 %v278, %v105
    %v285 = vmul.f32 %v281, %v106
    %286 = vst [vmem:[#allocation2 + $0xe0] sm:$0xff] %v282
    %287 = vst [vmem:[#allocation2 + $0xe8] sm:$0xff] %v283
    %288 = vst [vmem:[#allocation2 + $0xf0] sm:$0xff] %v284
    %289 = vst [vmem:[#allocation2 + $0xf8] sm:$0xff] %v285
    %290 = vrot.lane.b32.xlu0 %v50, 111
    %v291 = vpop.permute.xlu0 %290
    %292 = vrot.lane.b32.xlu0 %v51, 111
    %v293 = vpop.permute.xlu0 %292
    %294 = vrot.lane.b32.xlu0 %v52, 111
    %v295 = vpop.permute.xlu0 %294
    %296 = vrot.lane.b32.xlu0 %v53, 111
    %v297 = vpop.permute.xlu0 %296
    %vm298 = vcmp.lt.s32.totalorder %v55, 111
    %v299 = vsel %vm298, %v295, %v297
    %v300 = vsel %vm298, %v293, %v295
    %v301 = vsel %vm298, %v291, %v293
    %v302 = vsel %vm298, %v297, %v291
    %v303 = vmul.f32 %v301, %v119
    %v304 = vmul.f32 %v300, %v120
    %v305 = vmul.f32 %v299, %v121
    %v306 = vmul.f32 %v302, %v122
    %307 = vst [vmem:[#allocation2 + $0x100] sm:$0xff] %v303
    %308 = vst [vmem:[#allocation2 + $0x108] sm:$0xff] %v304
    %309 = vst [vmem:[#allocation2 + $0x110] sm:$0xff] %v305
    %310 = vst [vmem:[#allocation2 + $0x118] sm:$0xff] %v306
    %v311 = vld [vmem:[#allocation6] sm:$0xff]
    %v312 = vld [vmem:[#allocation2] sm:$0xff]
    %v313 = vld [vmem:[#allocation2 + $0x8] sm:$0xff]
    %v314 = vld [vmem:[#allocation2 + $0x10] sm:$0xff]
    %v315 = vld [vmem:[#allocation2 + $0x18] sm:$0xff]
    %v316 = vld [vmem:[#allocation2 + $0x20] sm:$0xff]
    %v317 = vld [vmem:[#allocation2 + $0x28] sm:$0xff]
    %v318 = vld [vmem:[#allocation2 + $0x30] sm:$0xff]
    %v319 = vld [vmem:[#allocation2 + $0x38] sm:$0xff]
    %v320 = vld [vmem:[#allocation2 + $0x40] sm:$0xff]
    %v321 = vld [vmem:[#allocation2 + $0x48] sm:$0xff]
    %v322 = vld [vmem:[#allocation2 + $0x50] sm:$0xff]
    %v323 = vld [vmem:[#allocation2 + $0x58] sm:$0xff]
    %v324 = vld [vmem:[#allocation2 + $0x60] sm:$0xff]
    %v325 = vld [vmem:[#allocation2 + $0x68] sm:$0xff]
    %v326 = vld [vmem:[#allocation2 + $0x70] sm:$0xff]
    %v327 = vld [vmem:[#allocation2 + $0x78] sm:$0xff]
    %v328 = vld [vmem:[#allocation2 + $0x80] sm:$0xff]
    %v329 = vld [vmem:[#allocation2 + $0x88] sm:$0xff]
    %v330 = vld [vmem:[#allocation2 + $0x90] sm:$0xff]
    %v331 = vld [vmem:[#allocation2 + $0x98] sm:$0xff]
    %v332 = vld [vmem:[#allocation2 + $0xa0] sm:$0xff]
    %v333 = vld [vmem:[#allocation2 + $0xa8] sm:$0xff]
    %v334 = vld [vmem:[#allocation2 + $0xb0] sm:$0xff]
    %v335 = vld [vmem:[#allocation2 + $0xb8] sm:$0xff]
    %v336 = vld [vmem:[#allocation2 + $0xc0] sm:$0xff]
    %v337 = vld [vmem:[#allocation2 + $0xc8] sm:$0xff]
    %v338 = vld [vmem:[#allocation2 + $0xd0] sm:$0xff]
    %v339 = vld [vmem:[#allocation2 + $0xd8] sm:$0xff]
    %v340 = vld [vmem:[#allocation2 + $0xe0] sm:$0xff]
    %v341 = vld [vmem:[#allocation2 + $0xe8] sm:$0xff]
    %v342 = vld [vmem:[#allocation2 + $0xf0] sm:$0xff]
    %v343 = vld [vmem:[#allocation2 + $0xf8] sm:$0xff]
    %v344 = vld [vmem:[#allocation2 + $0x100] sm:$0xff]
    %v345 = vld [vmem:[#allocation2 + $0x108] sm:$0xff]
    %v346 = vld [vmem:[#allocation2 + $0x110] sm:$0xff]
    %v347 = vld [vmem:[#allocation2 + $0x118] sm:$0xff]
    %vm348 = vcmask 588800
    %v350 = vsel %vm348, %v311, 0
    %352 = vmatprep.subr.mxu0 0.0
    %353 = vmatpush1.msra.mxu0 0.0
    %354 = vmatprep.subr.mxu0 0.0
    %355 = vmatpush1.msra.mxu0 0.0
    %356 = vmatprep.subr.mxu0 0.0
    %357 = vmatpush1.msra.mxu0 0.0
    %358 = vmatprep.subr.mxu0 0.0
    %359 = vmatpush1.msra.mxu0 0.0
    %360 = vmatprep.subr.mxu0 0.0
    %361 = vmatpush1.msra.mxu0 0.0
    %362 = vmatprep.subr.mxu0 0.0
    %363 = vmatpush1.msra.mxu0 0.0
    %364 = vmatprep.subr.mxu0 0.0
    %365 = vmatpush1.msra.mxu0 0.0
    %366 = vmatprep.subr.mxu0 %v345
    %367 = vmatpush1.msra.mxu0 %v344
    %368 = vmatprep.subr.mxu0 %v341
    %369 = vmatpush1.msra.mxu0 %v340
    %370 = vmatprep.subr.mxu0 %v337
    %371 = vmatpush1.msra.mxu0 %v336
    %372 = vmatprep.subr.mxu0 %v333
    %373 = vmatpush1.msra.mxu0 %v332
    %374 = vmatprep.subr.mxu0 %v329
    %375 = vmatpush1.msra.mxu0 %v328
    %376 = vmatprep.subr.mxu0 %v325
    %377 = vmatpush1.msra.mxu0 %v324
    %378 = vmatprep.subr.mxu0 %v321
    %379 = vmatpush1.msra.mxu0 %v320
    %380 = vmatprep.subr.mxu0 %v317
    %381 = vmatpush1.msra.mxu0 %v316
    %382 = vmatprep.subr.mxu0 %v313
    %383 = vmatpush1.msra.mxu0 %v312
    %384 = vmatprep.subr.mxu0 0.0
    %385 = vmatpush2.msra.mxu0 0.0
    %386 = vmatprep.subr.mxu0 0.0
    %387 = vmatpush2.msra.mxu0 0.0
    %388 = vmatprep.subr.mxu0 0.0
    %389 = vmatpush2.msra.mxu0 0.0
    %390 = vmatprep.subr.mxu0 0.0
    %391 = vmatpush2.msra.mxu0 0.0
    %392 = vmatprep.subr.mxu0 0.0
    %393 = vmatpush2.msra.mxu0 0.0
    %394 = vmatprep.subr.mxu0 0.0
    %395 = vmatpush2.msra.mxu0 0.0
    %396 = vmatprep.subr.mxu0 0.0
    %397 = vmatpush2.msra.mxu0 0.0
    %398 = vmatprep.subr.mxu0 0.0
    %399 = vmatpush2.msra.mxu0 0.0
    %400 = vmatprep.subr.mxu0 0.0
    %401 = vmatpush2.msra.mxu0 0.0
    %402 = vmatprep.subr.mxu0 0.0
    %403 = vmatpush2.msra.mxu0 0.0
    %404 = vmatprep.subr.mxu0 0.0
    %405 = vmatpush2.msra.mxu0 0.0
    %406 = vmatprep.subr.mxu0 0.0
    %407 = vmatpush2.msra.mxu0 0.0
    %408 = vmatprep.subr.mxu0 0.0
    %409 = vmatpush2.msra.mxu0 0.0
    %410 = vmatprep.subr.mxu0 0.0
    %411 = vmatpush2.msra.mxu0 0.0
    %412 = vmatprep.subr.mxu0 0.0
    %413 = vmatpush2.msra.mxu0 0.0
    %414 = vmatprep.subr.mxu0 0.0
    %415 = vmatpush2.msra.mxu0 0.0
    %416 = vmatprep.mubr.f32.mxu0 0.0
    %417 = vmatmul.mubr.f32.gmra.mxu0 %v350
    %v418 = vpop.f32.mrf.mxu0
    %v419 = vadd.f32 0.0, %v418
    %v420 = vpop.f32.mrf.mxu0
    %v421 = vadd.f32 0.0, %v420
    %422 = vdwg.mxu0
    %423 = vmatprep.subr.mxu0 0.0
    %424 = vmatpush1.msra.mxu0 0.0
    %425 = vmatprep.subr.mxu0 0.0
    %426 = vmatpush1.msra.mxu0 0.0
    %427 = vmatprep.subr.mxu0 0.0
    %428 = vmatpush1.msra.mxu0 0.0
    %429 = vmatprep.subr.mxu0 0.0
    %430 = vmatpush1.msra.mxu0 0.0
    %431 = vmatprep.subr.mxu0 0.0
    %432 = vmatpush1.msra.mxu0 0.0
    %433 = vmatprep.subr.mxu0 0.0
    %434 = vmatpush1.msra.mxu0 0.0
    %435 = vmatprep.subr.mxu0 0.0
    %436 = vmatpush1.msra.mxu0 0.0
    %437 = vmatprep.subr.mxu0 %v347
    %438 = vmatpush1.msra.mxu0 %v346
    %439 = vmatprep.subr.mxu0 %v343
    %440 = vmatpush1.msra.mxu0 %v342
    %441 = vmatprep.subr.mxu0 %v339
    %442 = vmatpush1.msra.mxu0 %v338
    %443 = vmatprep.subr.mxu0 %v335
    %444 = vmatpush1.msra.mxu0 %v334
    %445 = vmatprep.subr.mxu0 %v331
    %446 = vmatpush1.msra.mxu0 %v330
    %447 = vmatprep.subr.mxu0 %v327
    %448 = vmatpush1.msra.mxu0 %v326
    %449 = vmatprep.subr.mxu0 %v323
    %450 = vmatpush1.msra.mxu0 %v322
    %451 = vmatprep.subr.mxu0 %v319
    %452 = vmatpush1.msra.mxu0 %v318
    %453 = vmatprep.subr.mxu0 %v315
    %454 = vmatpush1.msra.mxu0 %v314
    %455 = vmatprep.subr.mxu0 0.0
    %456 = vmatpush2.msra.mxu0 0.0
    %457 = vmatprep.subr.mxu0 0.0
    %458 = vmatpush2.msra.mxu0 0.0
    %459 = vmatprep.subr.mxu0 0.0
    %460 = vmatpush2.msra.mxu0 0.0
    %461 = vmatprep.subr.mxu0 0.0
    %462 = vmatpush2.msra.mxu0 0.0
    %463 = vmatprep.subr.mxu0 0.0
    %464 = vmatpush2.msra.mxu0 0.0
    %465 = vmatprep.subr.mxu0 0.0
    %466 = vmatpush2.msra.mxu0 0.0
    %467 = vmatprep.subr.mxu0 0.0
    %468 = vmatpush2.msra.mxu0 0.0
    %469 = vmatprep.subr.mxu0 0.0
    %470 = vmatpush2.msra.mxu0 0.0
    %471 = vmatprep.subr.mxu0 0.0
    %472 = vmatpush2.msra.mxu0 0.0
    %473 = vmatprep.subr.mxu0 0.0
    %474 = vmatpush2.msra.mxu0 0.0
    %475 = vmatprep.subr.mxu0 0.0
    %476 = vmatpush2.msra.mxu0 0.0
    %477 = vmatprep.subr.mxu0 0.0
    %478 = vmatpush2.msra.mxu0 0.0
    %479 = vmatprep.subr.mxu0 0.0
    %480 = vmatpush2.msra.mxu0 0.0
    %481 = vmatprep.subr.mxu0 0.0
    %482 = vmatpush2.msra.mxu0 0.0
    %483 = vmatprep.subr.mxu0 0.0
    %484 = vmatpush2.msra.mxu0 0.0
    %485 = vmatprep.subr.mxu0 0.0
    %486 = vmatpush2.msra.mxu0 0.0
    %487 = vmatprep.mubr.f32.mxu0 0.0
    %488 = vmatmul.mubr.f32.gmra.mxu0 %v350
    %v489 = vpop.f32.mrf.mxu0
    %v490 = vadd.f32 0.0, %v489
    %v491 = vpop.f32.mrf.mxu0
    %v492 = vadd.f32 0.0, %v491
    %493 = vdwg.mxu0
    %v494 = vmul.f32 %v419, %v127
    %v495 = vmul.f32 %v421, %v128
    %v496 = vmul.f32 %v490, %v129
    %v497 = vmul.f32 %v492, %v130
    %v498 = vadd.f32 %v494, %v495
    %v499 = vadd.f32 %v498, %v496
    %v500 = vadd.f32 %v499, %v497
    %501 = vadd.xlane.f32.xlu0 %v500
    %v502 = vpop.xlane.xlu0 %501
    %v503 = vmul.f32 %v502, 0.00390625
    %v504 = vmul.f32 %v503, %v127
    %v505 = vmul.f32 %v503, %v128
    %v506 = vmul.f32 %v503, %v129
    %v507 = vmul.f32 %v503, %v130
    %v508 = vmul.f32 %v419, %v135
    %v509 = vmul.f32 %v421, %v136
    %v510 = vmul.f32 %v490, %v137
    %v511 = vmul.f32 %v492, %v138
    %v512 = vadd.f32 %v508, %v509
    %v513 = vadd.f32 %v512, %v510
    %v514 = vadd.f32 %v513, %v511
    %515 = vadd.xlane.f32.xlu0 %v514
    %v516 = vpop.xlane.xlu0 %515
    %v517 = vmul.f32 %v516, 0.00390625
    %v518 = vmul.f32 %v517, %v135
    %v519 = vmul.f32 %v517, %v136
    %v520 = vmul.f32 %v517, %v137
    %v521 = vmul.f32 %v517, %v138
    %v522 = vadd.f32 %v504, %v518
    %v523 = vadd.f32 %v505, %v519
    %v524 = vadd.f32 %v506, %v520
    %v525 = vadd.f32 %v507, %v521
    %v526 = vsub.f32 %v419, %v522
    %v527 = vsub.f32 %v421, %v523
    %v528 = vsub.f32 %v490, %v524
    %v529 = vsub.f32 %v492, %v525
    %v530 = vmul.f32 %v526, %v526
    %v531 = vmul.f32 %v527, %v527
    %v532 = vmul.f32 %v528, %v528
    %v533 = vmul.f32 %v529, %v529
    %v534 = vmul.f32 %v530, %v127
    %v535 = vmul.f32 %v531, %v128
    %v536 = vmul.f32 %v532, %v129
    %v537 = vmul.f32 %v533, %v130
    %v538 = vadd.f32 %v534, %v535
    %v539 = vadd.f32 %v538, %v536
    %v540 = vadd.f32 %v539, %v537
    %541 = vadd.xlane.f32.xlu0 %v540
    %v542 = vpop.xlane.xlu0 %541
    %v543 = vmul.f32 %v542, 0.00390625
    %v544 = vadd.f32 %v543, 1e-05
    %v545 = vrsqrt.pop %v544
    %v546 = vmul.f32 %v545, %v127
    %v547 = vmul.f32 %v545, %v128
    %v548 = vmul.f32 %v545, %v129
    %v549 = vmul.f32 %v545, %v130
    %v550 = vmul.f32 %v530, %v135
    %v551 = vmul.f32 %v531, %v136
    %v552 = vmul.f32 %v532, %v137
    %v553 = vmul.f32 %v533, %v138
    %v554 = vadd.f32 %v550, %v551
    %v555 = vadd.f32 %v554, %v552
    %v556 = vadd.f32 %v555, %v553
    %557 = vadd.xlane.f32.xlu0 %v556
    %v558 = vpop.xlane.xlu0 %557
    %v559 = vmul.f32 %v558, 0.00390625
    %v560 = vadd.f32 %v559, 1e-05
    %v561 = vrsqrt.pop %v560
    %v562 = vmul.f32 %v561, %v135
    %v563 = vmul.f32 %v561, %v136
    %v564 = vmul.f32 %v561, %v137
    %v565 = vmul.f32 %v561, %v138
    %v566 = vadd.f32 %v546, %v562
    %v567 = vadd.f32 %v547, %v563
    %v568 = vadd.f32 %v548, %v564
    %v569 = vadd.f32 %v549, %v565
    %v570 = vmul.f32 %v526, %v566
    %v571 = vmul.f32 %v527, %v567
    %v572 = vmul.f32 %v528, %v568
    %v573 = vmul.f32 %v529, %v569
    %vm574 = vcmp.ge.f32.partialorder %v570, 0.0
    %vm575 = vcmp.ge.f32.partialorder %v571, 0.0
    %vm576 = vcmp.ge.f32.partialorder %v572, 0.0
    %vm577 = vcmp.ge.f32.partialorder %v573, 0.0
    %v578 = vmul.f32 %v570, 0.01
    %v579 = vmul.f32 %v571, 0.01
    %v580 = vmul.f32 %v572, 0.01
    %v581 = vmul.f32 %v573, 0.01
    %v582 = vsel %vm574, %v570, %v578
    %v583 = vsel %vm575, %v571, %v579
    %v584 = vsel %vm576, %v572, %v580
    %v585 = vsel %vm577, %v573, %v581
    %586 = vrot.lane.b32.xlu0 %v582, 17
    %v587 = vpop.permute.xlu0 %586
    %588 = vrot.lane.b32.xlu0 %v583, 17
    %v589 = vpop.permute.xlu0 %588
    %590 = vrot.lane.b32.xlu0 %v584, 17
    %v591 = vpop.permute.xlu0 %590
    %592 = vrot.lane.b32.xlu0 %v585, 17
    %v593 = vpop.permute.xlu0 %592
    %v594 = vsel %vm147, %v591, %v593
    %v595 = vsel %vm147, %v589, %v591
    %v596 = vsel %vm147, %v587, %v589
    %v597 = vsel %vm147, %v593, %v587
    %v598 = vmul.f32 %v597, %v107
    %v599 = vmul.f32 %v596, %v108
    %v600 = vmul.f32 %v595, %v109
    %v601 = vmul.f32 %v594, %v110
    %602 = vst [vmem:[#allocation2] sm:$0xff] %v598
    %603 = vst [vmem:[#allocation2 + $0x8] sm:$0xff] %v599
    %604 = vst [vmem:[#allocation2 + $0x10] sm:$0xff] %v600
    %605 = vst [vmem:[#allocation2 + $0x18] sm:$0xff] %v601
    %606 = vrot.lane.b32.xlu0 %v582, 16
    %v607 = vpop.permute.xlu0 %606
    %608 = vrot.lane.b32.xlu0 %v583, 16
    %v609 = vpop.permute.xlu0 %608
    %610 = vrot.lane.b32.xlu0 %v584, 16
    %v611 = vpop.permute.xlu0 %610
    %612 = vrot.lane.b32.xlu0 %v585, 16
    %v613 = vpop.permute.xlu0 %612
    %v614 = vsel %vm168, %v611, %v613
    %v615 = vsel %vm168, %v609, %v611
    %v616 = vsel %vm168, %v607, %v609
    %v617 = vsel %vm168, %v613, %v607
    %v618 = vmul.f32 %v617, %v95
    %v619 = vmul.f32 %v616, %v96
    %v620 = vmul.f32 %v615, %v97
    %v621 = vmul.f32 %v614, %v98
    %622 = vst [vmem:[#allocation2 + $0x20] sm:$0xff] %v618
    %623 = vst [vmem:[#allocation2 + $0x28] sm:$0xff] %v619
    %624 = vst [vmem:[#allocation2 + $0x30] sm:$0xff] %v620
    %625 = vst [vmem:[#allocation2 + $0x38] sm:$0xff] %v621
    %626 = vrot.lane.b32.xlu0 %v582, 15
    %v627 = vpop.permute.xlu0 %626
    %628 = vrot.lane.b32.xlu0 %v583, 15
    %v629 = vpop.permute.xlu0 %628
    %630 = vrot.lane.b32.xlu0 %v584, 15
    %v631 = vpop.permute.xlu0 %630
    %632 = vrot.lane.b32.xlu0 %v585, 15
    %v633 = vpop.permute.xlu0 %632
    %v634 = vsel %vm189, %v631, %v633
    %v635 = vsel %vm189, %v629, %v631
    %v636 = vsel %vm189, %v627, %v629
    %v637 = vsel %vm189, %v633, %v627
    %v638 = vmul.f32 %v637, %v111
    %v639 = vmul.f32 %v636, %v112
    %v640 = vmul.f32 %v635, %v113
    %v641 = vmul.f32 %v634, %v114
    %642 = vst [vmem:[#allocation2 + $0x40] sm:$0xff] %v638
    %643 = vst [vmem:[#allocation2 + $0x48] sm:$0xff] %v639
    %644 = vst [vmem:[#allocation2 + $0x50] sm:$0xff] %v640
    %645 = vst [vmem:[#allocation2 + $0x58] sm:$0xff] %v641
    %646 = vrot.lane.b32.xlu0 %v582, 1
    %v647 = vpop.permute.xlu0 %646
    %648 = vrot.lane.b32.xlu0 %v583, 1
    %v649 = vpop.permute.xlu0 %648
    %650 = vrot.lane.b32.xlu0 %v584, 1
    %v651 = vpop.permute.xlu0 %650
    %652 = vrot.lane.b32.xlu0 %v585, 1
    %v653 = vpop.permute.xlu0 %652
    %v654 = vsel %vm210, %v651, %v653
    %v655 = vsel %vm210, %v649, %v651
    %v656 = vsel %vm210, %v647, %v649
    %v657 = vsel %vm210, %v653, %v647
    %v658 = vmul.f32 %v657, %v79
    %v659 = vmul.f32 %v656, %v80
    %v660 = vmul.f32 %v655, %v81
    %v661 = vmul.f32 %v654, %v82
    %662 = vst [vmem:[#allocation2 + $0x60] sm:$0xff] %v658
    %663 = vst [vmem:[#allocation2 + $0x68] sm:$0xff] %v659
    %664 = vst [vmem:[#allocation2 + $0x70] sm:$0xff] %v660
    %665 = vst [vmem:[#allocation2 + $0x78] sm:$0xff] %v661
    %666 = vst [vmem:[#allocation2 + $0x80] sm:$0xff] %v582
    %667 = vst [vmem:[#allocation2 + $0x88] sm:$0xff] %v583
    %668 = vst [vmem:[#allocation2 + $0x90] sm:$0xff] %v584
    %669 = vst [vmem:[#allocation2 + $0x98] sm:$0xff] %v585
    %670 = vrot.lane.b32.xlu0 %v582, 127
    %v671 = vpop.permute.xlu0 %670
    %672 = vrot.lane.b32.xlu0 %v583, 127
    %v673 = vpop.permute.xlu0 %672
    %674 = vrot.lane.b32.xlu0 %v584, 127
    %v675 = vpop.permute.xlu0 %674
    %676 = vrot.lane.b32.xlu0 %v585, 127
    %v677 = vpop.permute.xlu0 %676
    %v678 = vsel %vm235, %v675, %v677
    %v679 = vsel %vm235, %v673, %v675
    %v680 = vsel %vm235, %v671, %v673
    %v681 = vsel %vm235, %v677, %v671
    %v682 = vmul.f32 %v680, %v87
    %v683 = vmul.f32 %v679, %v88
    %v684 = vmul.f32 %v678, %v89
    %v685 = vmul.f32 %v681, %v90
    %686 = vst [vmem:[#allocation2 + $0xa0] sm:$0xff] %v682
    %687 = vst [vmem:[#allocation2 + $0xa8] sm:$0xff] %v683
    %688 = vst [vmem:[#allocation2 + $0xb0] sm:$0xff] %v684
    %689 = vst [vmem:[#allocation2 + $0xb8] sm:$0xff] %v685
    %690 = vrot.lane.b32.xlu0 %v582, 113
    %v691 = vpop.permute.xlu0 %690
    %692 = vrot.lane.b32.xlu0 %v583, 113
    %v693 = vpop.permute.xlu0 %692
    %694 = vrot.lane.b32.xlu0 %v584, 113
    %v695 = vpop.permute.xlu0 %694
    %696 = vrot.lane.b32.xlu0 %v585, 113
    %v697 = vpop.permute.xlu0 %696
    %v698 = vsel %vm256, %v695, %v697
    %v699 = vsel %vm256, %v693, %v695
    %v700 = vsel %vm256, %v691, %v693
    %v701 = vsel %vm256, %v697, %v691
    %v702 = vmul.f32 %v700, %v115
    %v703 = vmul.f32 %v699, %v116
    %v704 = vmul.f32 %v698, %v117
    %v705 = vmul.f32 %v701, %v118
    %706 = vst [vmem:[#allocation2 + $0xc0] sm:$0xff] %v702
    %707 = vst [vmem:[#allocation2 + $0xc8] sm:$0xff] %v703
    %708 = vst [vmem:[#allocation2 + $0xd0] sm:$0xff] %v704
    %709 = vst [vmem:[#allocation2 + $0xd8] sm:$0xff] %v705
    %710 = vrot.lane.b32.xlu0 %v582, 112
    %v711 = vpop.permute.xlu0 %710
    %712 = vrot.lane.b32.xlu0 %v583, 112
    %v713 = vpop.permute.xlu0 %712
    %714 = vrot.lane.b32.xlu0 %v584, 112
    %v715 = vpop.permute.xlu0 %714
    %716 = vrot.lane.b32.xlu0 %v585, 112
    %v717 = vpop.permute.xlu0 %716
    %v718 = vsel %vm277, %v715, %v717
    %v719 = vsel %vm277, %v713, %v715
    %v720 = vsel %vm277, %v711, %v713
    %v721 = vsel %vm277, %v717, %v711
    %v722 = vmul.f32 %v720, %v103
    %v723 = vmul.f32 %v719, %v104
    %v724 = vmul.f32 %v718, %v105
    %v725 = vmul.f32 %v721, %v106
    %726 = vst [vmem:[#allocation2 + $0xe0] sm:$0xff] %v722
    %727 = vst [vmem:[#allocation2 + $0xe8] sm:$0xff] %v723
    %728 = vst [vmem:[#allocation2 + $0xf0] sm:$0xff] %v724
    %729 = vst [vmem:[#allocation2 + $0xf8] sm:$0xff] %v725
    %730 = vrot.lane.b32.xlu0 %v582, 111
    %v731 = vpop.permute.xlu0 %730
    %732 = vrot.lane.b32.xlu0 %v583, 111
    %v733 = vpop.permute.xlu0 %732
    %734 = vrot.lane.b32.xlu0 %v584, 111
    %v735 = vpop.permute.xlu0 %734
    %736 = vrot.lane.b32.xlu0 %v585, 111
    %v737 = vpop.permute.xlu0 %736
    %v738 = vsel %vm298, %v735, %v737
    %v739 = vsel %vm298, %v733, %v735
    %v740 = vsel %vm298, %v731, %v733
    %v741 = vsel %vm298, %v737, %v731
    %v742 = vmul.f32 %v740, %v119
    %v743 = vmul.f32 %v739, %v120
    %v744 = vmul.f32 %v738, %v121
    %v745 = vmul.f32 %v741, %v122
    %746 = vst [vmem:[#allocation2 + $0x100] sm:$0xff] %v742
    %747 = vst [vmem:[#allocation2 + $0x108] sm:$0xff] %v743
    %748 = vst [vmem:[#allocation2 + $0x110] sm:$0xff] %v744
    %749 = vst [vmem:[#allocation2 + $0x118] sm:$0xff] %v745
    %v750 = vld [vmem:[#allocation8] sm:$0xff]
    %v751 = vld [vmem:[#allocation2] sm:$0xff]
    %v752 = vld [vmem:[#allocation2 + $0x8] sm:$0xff]
    %v753 = vld [vmem:[#allocation2 + $0x10] sm:$0xff]
    %v754 = vld [vmem:[#allocation2 + $0x18] sm:$0xff]
    %v755 = vld [vmem:[#allocation2 + $0x20] sm:$0xff]
    %v756 = vld [vmem:[#allocation2 + $0x28] sm:$0xff]
    %v757 = vld [vmem:[#allocation2 + $0x30] sm:$0xff]
    %v758 = vld [vmem:[#allocation2 + $0x38] sm:$0xff]
    %v759 = vld [vmem:[#allocation2 + $0x40] sm:$0xff]
    %v760 = vld [vmem:[#allocation2 + $0x48] sm:$0xff]
    %v761 = vld [vmem:[#allocation2 + $0x50] sm:$0xff]
    %v762 = vld [vmem:[#allocation2 + $0x58] sm:$0xff]
    %v763 = vld [vmem:[#allocation2 + $0x60] sm:$0xff]
    %v764 = vld [vmem:[#allocation2 + $0x68] sm:$0xff]
    %v765 = vld [vmem:[#allocation2 + $0x70] sm:$0xff]
    %v766 = vld [vmem:[#allocation2 + $0x78] sm:$0xff]
    %v767 = vld [vmem:[#allocation2 + $0x80] sm:$0xff]
    %v768 = vld [vmem:[#allocation2 + $0x88] sm:$0xff]
    %v769 = vld [vmem:[#allocation2 + $0x90] sm:$0xff]
    %v770 = vld [vmem:[#allocation2 + $0x98] sm:$0xff]
    %v771 = vld [vmem:[#allocation2 + $0xa0] sm:$0xff]
    %v772 = vld [vmem:[#allocation2 + $0xa8] sm:$0xff]
    %v773 = vld [vmem:[#allocation2 + $0xb0] sm:$0xff]
    %v774 = vld [vmem:[#allocation2 + $0xb8] sm:$0xff]
    %v775 = vld [vmem:[#allocation2 + $0xc0] sm:$0xff]
    %v776 = vld [vmem:[#allocation2 + $0xc8] sm:$0xff]
    %v777 = vld [vmem:[#allocation2 + $0xd0] sm:$0xff]
    %v778 = vld [vmem:[#allocation2 + $0xd8] sm:$0xff]
    %v779 = vld [vmem:[#allocation2 + $0xe0] sm:$0xff]
    %v780 = vld [vmem:[#allocation2 + $0xe8] sm:$0xff]
    %v781 = vld [vmem:[#allocation2 + $0xf0] sm:$0xff]
    %v782 = vld [vmem:[#allocation2 + $0xf8] sm:$0xff]
    %v783 = vld [vmem:[#allocation2 + $0x100] sm:$0xff]
    %v784 = vld [vmem:[#allocation2 + $0x108] sm:$0xff]
    %v785 = vld [vmem:[#allocation2 + $0x110] sm:$0xff]
    %v786 = vld [vmem:[#allocation2 + $0x118] sm:$0xff]
    %v788 = vsel %vm348, %v750, 0
    %790 = vmatprep.subr.mxu0 0.0
    %791 = vmatpush1.msra.mxu0 0.0
    %792 = vmatprep.subr.mxu0 0.0
    %793 = vmatpush1.msra.mxu0 0.0
    %794 = vmatprep.subr.mxu0 0.0
    %795 = vmatpush1.msra.mxu0 0.0
    %796 = vmatprep.subr.mxu0 0.0
    %797 = vmatpush1.msra.mxu0 0.0
    %798 = vmatprep.subr.mxu0 0.0
    %799 = vmatpush1.msra.mxu0 0.0
    %800 = vmatprep.subr.mxu0 0.0
    %801 = vmatpush1.msra.mxu0 0.0
    %802 = vmatprep.subr.mxu0 0.0
    %803 = vmatpush1.msra.mxu0 0.0
    %804 = vmatprep.subr.mxu0 %v784
    %805 = vmatpush1.msra.mxu0 %v783
    %806 = vmatprep.subr.mxu0 %v780
    %807 = vmatpush1.msra.mxu0 %v779
    %808 = vmatprep.subr.mxu0 %v776
    %809 = vmatpush1.msra.mxu0 %v775
    %810 = vmatprep.subr.mxu0 %v772
    %811 = vmatpush1.msra.mxu0 %v771
    %812 = vmatprep.subr.mxu0 %v768
    %813 = vmatpush1.msra.mxu0 %v767
    %814 = vmatprep.subr.mxu0 %v764
    %815 = vmatpush1.msra.mxu0 %v763
    %816 = vmatprep.subr.mxu0 %v760
    %817 = vmatpush1.msra.mxu0 %v759
    %818 = vmatprep.subr.mxu0 %v756
    %819 = vmatpush1.msra.mxu0 %v755
    %820 = vmatprep.subr.mxu0 %v752
    %821 = vmatpush1.msra.mxu0 %v751
    %822 = vmatprep.subr.mxu0 0.0
    %823 = vmatpush2.msra.mxu0 0.0
    %824 = vmatprep.subr.mxu0 0.0
    %825 = vmatpush2.msra.mxu0 0.0
    %826 = vmatprep.subr.mxu0 0.0
    %827 = vmatpush2.msra.mxu0 0.0
    %828 = vmatprep.subr.mxu0 0.0
    %829 = vmatpush2.msra.mxu0 0.0
    %830 = vmatprep.subr.mxu0 0.0
    %831 = vmatpush2.msra.mxu0 0.0
    %832 = vmatprep.subr.mxu0 0.0
    %833 = vmatpush2.msra.mxu0 0.0
    %834 = vmatprep.subr.mxu0 0.0
    %835 = vmatpush2.msra.mxu0 0.0
    %836 = vmatprep.subr.mxu0 0.0
    %837 = vmatpush2.msra.mxu0 0.0
    %838 = vmatprep.subr.mxu0 0.0
    %839 = vmatpush2.msra.mxu0 0.0
    %840 = vmatprep.subr.mxu0 0.0
    %841 = vmatpush2.msra.mxu0 0.0
    %842 = vmatprep.subr.mxu0 0.0
    %843 = vmatpush2.msra.mxu0 0.0
    %844 = vmatprep.subr.mxu0 0.0
    %845 = vmatpush2.msra.mxu0 0.0
    %846 = vmatprep.subr.mxu0 0.0
    %847 = vmatpush2.msra.mxu0 0.0
    %848 = vmatprep.subr.mxu0 0.0
    %849 = vmatpush2.msra.mxu0 0.0
    %850 = vmatprep.subr.mxu0 0.0
    %851 = vmatpush2.msra.mxu0 0.0
    %852 = vmatprep.subr.mxu0 0.0
    %853 = vmatpush2.msra.mxu0 0.0
    %854 = vmatprep.mubr.f32.mxu0 0.0
    %855 = vmatmul.mubr.f32.gmra.mxu0 %v788
    %v856 = vpop.f32.mrf.mxu0
    %v857 = vadd.f32 0.0, %v856
    %v858 = vpop.f32.mrf.mxu0
    %v859 = vadd.f32 0.0, %v858
    %860 = vdwg.mxu0
    %861 = vmatprep.subr.mxu0 0.0
    %862 = vmatpush1.msra.mxu0 0.0
    %863 = vmatprep.subr.mxu0 0.0
    %864 = vmatpush1.msra.mxu0 0.0
    %865 = vmatprep.subr.mxu0 0.0
    %866 = vmatpush1.msra.mxu0 0.0
    %867 = vmatprep.subr.mxu0 0.0
    %868 = vmatpush1.msra.mxu0 0.0
    %869 = vmatprep.subr.mxu0 0.0
    %870 = vmatpush1.msra.mxu0 0.0
    %871 = vmatprep.subr.mxu0 0.0
    %872 = vmatpush1.msra.mxu0 0.0
    %873 = vmatprep.subr.mxu0 0.0
    %874 = vmatpush1.msra.mxu0 0.0
    %875 = vmatprep.subr.mxu0 %v786
    %876 = vmatpush1.msra.mxu0 %v785
    %877 = vmatprep.subr.mxu0 %v782
    %878 = vmatpush1.msra.mxu0 %v781
    %879 = vmatprep.subr.mxu0 %v778
    %880 = vmatpush1.msra.mxu0 %v777
    %881 = vmatprep.subr.mxu0 %v774
    %882 = vmatpush1.msra.mxu0 %v773
    %883 = vmatprep.subr.mxu0 %v770
    %884 = vmatpush1.msra.mxu0 %v769
    %885 = vmatprep.subr.mxu0 %v766
    %886 = vmatpush1.msra.mxu0 %v765
    %887 = vmatprep.subr.mxu0 %v762
    %888 = vmatpush1.msra.mxu0 %v761
    %889 = vmatprep.subr.mxu0 %v758
    %890 = vmatpush1.msra.mxu0 %v757
    %891 = vmatprep.subr.mxu0 %v754
    %892 = vmatpush1.msra.mxu0 %v753
    %893 = vmatprep.subr.mxu0 0.0
    %894 = vmatpush2.msra.mxu0 0.0
    %895 = vmatprep.subr.mxu0 0.0
    %896 = vmatpush2.msra.mxu0 0.0
    %897 = vmatprep.subr.mxu0 0.0
    %898 = vmatpush2.msra.mxu0 0.0
    %899 = vmatprep.subr.mxu0 0.0
    %900 = vmatpush2.msra.mxu0 0.0
    %901 = vmatprep.subr.mxu0 0.0
    %902 = vmatpush2.msra.mxu0 0.0
    %903 = vmatprep.subr.mxu0 0.0
    %904 = vmatpush2.msra.mxu0 0.0
    %905 = vmatprep.subr.mxu0 0.0
    %906 = vmatpush2.msra.mxu0 0.0
    %907 = vmatprep.subr.mxu0 0.0
    %908 = vmatpush2.msra.mxu0 0.0
    %909 = vmatprep.subr.mxu0 0.0
    %910 = vmatpush2.msra.mxu0 0.0
    %911 = vmatprep.subr.mxu0 0.0
    %912 = vmatpush2.msra.mxu0 0.0
    %913 = vmatprep.subr.mxu0 0.0
    %914 = vmatpush2.msra.mxu0 0.0
    %915 = vmatprep.subr.mxu0 0.0
    %916 = vmatpush2.msra.mxu0 0.0
    %917 = vmatprep.subr.mxu0 0.0
    %918 = vmatpush2.msra.mxu0 0.0
    %919 = vmatprep.subr.mxu0 0.0
    %920 = vmatpush2.msra.mxu0 0.0
    %921 = vmatprep.subr.mxu0 0.0
    %922 = vmatpush2.msra.mxu0 0.0
    %923 = vmatprep.subr.mxu0 0.0
    %924 = vmatpush2.msra.mxu0 0.0
    %925 = vmatprep.mubr.f32.mxu0 0.0
    %926 = vmatmul.mubr.f32.gmra.mxu0 %v788
    %v927 = vpop.f32.mrf.mxu0
    %v928 = vadd.f32 0.0, %v927
    %v929 = vpop.f32.mrf.mxu0
    %v930 = vadd.f32 0.0, %v929
    %931 = vdwg.mxu0
    %v932 = vmul.f32 %v857, %v127
    %v933 = vmul.f32 %v859, %v128
    %v934 = vmul.f32 %v928, %v129
    %v935 = vmul.f32 %v930, %v130
    %v936 = vadd.f32 %v932, %v933
    %v937 = vadd.f32 %v936, %v934
    %v938 = vadd.f32 %v937, %v935
    %939 = vadd.xlane.f32.xlu0 %v938
    %v940 = vpop.xlane.xlu0 %939
    %v941 = vmul.f32 %v940, 0.00390625
    %v942 = vmul.f32 %v941, %v127
    %v943 = vmul.f32 %v941, %v128
    %v944 = vmul.f32 %v941, %v129
    %v945 = vmul.f32 %v941, %v130
    %v946 = vmul.f32 %v857, %v135
    %v947 = vmul.f32 %v859, %v136
    %v948 = vmul.f32 %v928, %v137
    %v949 = vmul.f32 %v930, %v138
    %v950 = vadd.f32 %v946, %v947
    %v951 = vadd.f32 %v950, %v948
    %v952 = vadd.f32 %v951, %v949
    %953 = vadd.xlane.f32.xlu0 %v952
    %v954 = vpop.xlane.xlu0 %953
    %v955 = vmul.f32 %v954, 0.00390625
    %v956 = vmul.f32 %v955, %v135
    %v957 = vmul.f32 %v955, %v136
    %v958 = vmul.f32 %v955, %v137
    %v959 = vmul.f32 %v955, %v138
    %v960 = vadd.f32 %v942, %v956
    %v961 = vadd.f32 %v943, %v957
    %v962 = vadd.f32 %v944, %v958
    %v963 = vadd.f32 %v945, %v959
    %v964 = vsub.f32 %v857, %v960
    %v965 = vsub.f32 %v859, %v961
    %v966 = vsub.f32 %v928, %v962
    %v967 = vsub.f32 %v930, %v963
    %v968 = vmul.f32 %v964, %v964
    %v969 = vmul.f32 %v965, %v965
    %v970 = vmul.f32 %v966, %v966
    %v971 = vmul.f32 %v967, %v967
    %v972 = vmul.f32 %v968, %v127
    %v973 = vmul.f32 %v969, %v128
    %v974 = vmul.f32 %v970, %v129
    %v975 = vmul.f32 %v971, %v130
    %v976 = vadd.f32 %v972, %v973
    %v977 = vadd.f32 %v976, %v974
    %v978 = vadd.f32 %v977, %v975
    %979 = vadd.xlane.f32.xlu0 %v978
    %v980 = vpop.xlane.xlu0 %979
    %v981 = vmul.f32 %v980, 0.00390625
    %v982 = vadd.f32 %v981, 1e-05
    %v983 = vrsqrt.pop %v982
    %v984 = vmul.f32 %v983, %v127
    %v985 = vmul.f32 %v983, %v128
    %v986 = vmul.f32 %v983, %v129
    %v987 = vmul.f32 %v983, %v130
    %v988 = vmul.f32 %v968, %v135
    %v989 = vmul.f32 %v969, %v136
    %v990 = vmul.f32 %v970, %v137
    %v991 = vmul.f32 %v971, %v138
    %v992 = vadd.f32 %v988, %v989
    %v993 = vadd.f32 %v992, %v990
    %v994 = vadd.f32 %v993, %v991
    %995 = vadd.xlane.f32.xlu0 %v994
    %v996 = vpop.xlane.xlu0 %995
    %v997 = vmul.f32 %v996, 0.00390625
    %v998 = vadd.f32 %v997, 1e-05
    %v999 = vrsqrt.pop %v998
    %v1000 = vmul.f32 %v999, %v135
    %v1001 = vmul.f32 %v999, %v136
    %v1002 = vmul.f32 %v999, %v137
    %v1003 = vmul.f32 %v999, %v138
    %v1004 = vadd.f32 %v984, %v1000
    %v1005 = vadd.f32 %v985, %v1001
    %v1006 = vadd.f32 %v986, %v1002
    %v1007 = vadd.f32 %v987, %v1003
    %v1008 = vmul.f32 %v964, %v1004
    %v1009 = vmul.f32 %v965, %v1005
    %v1010 = vmul.f32 %v966, %v1006
    %v1011 = vmul.f32 %v967, %v1007
    %v1012 = vadd.f32 %v1008, %v50
    %v1013 = vadd.f32 %v1009, %v51
    %v1014 = vadd.f32 %v1010, %v52
    %v1015 = vadd.f32 %v1011, %v53
    %vm1016 = vcmp.ge.f32.partialorder %v1012, 0.0
    %vm1017 = vcmp.ge.f32.partialorder %v1013, 0.0
    %vm1018 = vcmp.ge.f32.partialorder %v1014, 0.0
    %vm1019 = vcmp.ge.f32.partialorder %v1015, 0.0
    %v1020 = vmul.f32 %v1012, 0.01
    %v1021 = vmul.f32 %v1013, 0.01
    %v1022 = vmul.f32 %v1014, 0.01
    %v1023 = vmul.f32 %v1015, 0.01
    %v1024 = vsel %vm1016, %v1012, %v1020
    %v1025 = vsel %vm1017, %v1013, %v1021
    %v1026 = vsel %vm1018, %v1014, %v1022
    %v1027 = vsel %vm1019, %v1015, %v1023
    %1028 = vst [vmem:[#allocation9] sm:$0xff] %v1024
    %1029 = vst [vmem:[#allocation9 + $0x8] sm:$0xff] %v1025
    %1030 = vst [vmem:[#allocation9 + $0x10] sm:$0xff] %v1026
    %1031 = vst [vmem:[#allocation9 + $0x18] sm:$0xff] %v1027
    // Predicated region
    $region26: #{tpu_custom_call.1} parent=1 // pred_check
      _
    $region27: #{tpu_custom_call.1} parent=1 // pred_check_branch
      %1033 = sbr.rel (0) target = $region29
    $region28: #{tpu_custom_call.1} parent=1 // pred_region
      %s1035 = ssub.s32 512, 512
      %1036 = vsyncadd [#allocation5], %s1035
      %s1038 = sshll.u32 [#allocation9], 4
      %s1039 = int_to_ptr.vmem [resolvable:$true] %s1038
      %1041 = dma.vmem_to_hbm [thread:$0]  %s1039, 512, %s3, [#allocation5]
    $region29: #{tpu_custom_call.1} parent=1 // pred_fallthru
      _
    // Predicated region
    $region30: #{tpu_custom_call.1} parent=1 // pred_check
      _
    $region31: #{tpu_custom_call.1} parent=1 // pred_check_branch
      %1043 = sbr.rel (0) target = $region33
    $region32: #{tpu_custom_call.1} parent=1 // pred_region
      %1044 = dma.done [#allocation5], 512
    $region33: #{tpu_custom_call.1} parent=1 // pred_fallthru
      _
    %1045 = vsyncpa [#allocation4], 1
    %1046 = vsyncpa [#allocation7], 1
    %1047 = vsyncpa [#allocation5], 1

</llo_original>
